<compile_context>
chip_gen: v7x
topology: tpu7x:2x2x1
jax: 0.10.0
libtpu: 0.0.40
codegen_flags: <defaults>
</compile_context>

<pallas_src>
import jax
import jax.numpy as jnp
from jax.experimental import pallas as pl
from jax.experimental.pallas import tpu as pltpu


# --------------------------------------------------------------------------- #
# helpers                                                                      #
# --------------------------------------------------------------------------- #
def _vmem_limit_bytes():
    """Generation-aware VMEM budget (v5e/v6e: 128 MiB physical, v7x: 64 MiB)."""
    try:
        cap = pltpu.get_tpu_info().vmem_capacity_bytes
    except Exception:
        cap = 64 * 1024 * 1024          # conservative fallback: assume v7x-sized VMEM
    return int(min(cap * 3 // 4, 96 * 1024 * 1024))


def _largest_divisor_at_most(n, cap):
    cap = max(1, min(n, cap))
    for d in range(cap, 0, -1):
        if n % d == 0:
            return d
    return 1


# --------------------------------------------------------------------------- #
# Kernel 1: fused-im2col transposed conv (one image, one output-row parity)    #
# --------------------------------------------------------------------------- #
def _convt_phase_kernel(xp_ref, w_ref, y_ref, stats_ref):
    # xp_ref:    (1, H+2, W+2, Cin)   bf16  zero-padded NHWC input (VMEM resident)
    # w_ref:     (1, 2, 4*Cin, Cout)  bf16  K-concatenated taps for THIS row parity,
    #                                       K block order: dh*2 + dw  (dh, dw in {0,1})
    # y_ref:     (1, 2, H, W, Cout)   bf16  phase-split conv output (pw in {0,1})
    # stats_ref: (1, 1, 2, Cout)      f32   per-(image, ph) [sum ; sum of squares]
    _, _, H, W, Cout = y_ref.shape
    Cin = xp_ref.shape[-1]
    ph = pl.program_id(1)                       # output-row parity of this grid step

    s = jnp.zeros((1, Cout), jnp.float32)
    sq = jnp.zeros((1, Cout), jnp.float32)

    for pw in (0, 1):                           # static unroll, one MXU dot each
        # Fused im2col, K-concatenated taps: each tap is a shifted slice of the resident
        # padded block; one (H*W, 4*Cin) @ (4*Cin, Cout) dot replaces 4 dots + 3 adds.
        taps = [xp_ref[0, pl.ds(ph + dh, H), pl.ds(pw + dw, W), :]
                for dh in (0, 1) for dw in (0, 1)]
        lhs = jnp.concatenate(taps, axis=-1).reshape(H * W, 4 * Cin)
        acc = jnp.dot(lhs, w_ref[0, pw], preferred_element_type=jnp.float32)

        # BatchNorm partial statistics in f32 (before the bf16 rounding of y).
        s = s + jnp.sum(acc, axis=0, keepdims=True)
        sq = sq + jnp.sum(acc * acc, axis=0, keepdims=True)

        y_ref[0, pw] = acc.reshape(H, W, Cout).astype(y_ref.dtype)

    stats_ref[0, 0] = jnp.concatenate([s, sq], axis=0)         # (2, Cout)


# --------------------------------------------------------------------------- #
# Kernel 2: folded BatchNorm + ReLU + channel concat (tiled elementwise)       #
# --------------------------------------------------------------------------- #
def _bn_relu_concat_kernel(y_ref, skip_ref, scale_ref, shift_ref, out_ref):
    # y_ref:    (1, TH, Wo, Cout)        bf16
    # skip_ref: (1, TH, Wo, Cskip)       skip dtype (passed through unchanged)
    # scale/shift: (1, 1, Cout)          f32   (folded training-mode BN)
    # out_ref:  (1, TH, Wo, Cout+Cskip)  out dtype
    Cout = y_ref.shape[-1]
    yn = jnp.maximum(y_ref[0].astype(jnp.float32) * scale_ref[0] + shift_ref[0], 0.0)
    # Two stores instead of an in-register lane concatenate.
    # TODO(synk): when Cout is not a 128-multiple the second store is lane-masked;
    # callers get the best store path with 128-multiple channel counts.
    out_ref[0, :, :, :Cout] = yn.astype(out_ref.dtype)
    out_ref[0, :, :, Cout:] = skip_ref[0].astype(out_ref.dtype)


# --------------------------------------------------------------------------- #
# NHWC-native forward (preferred inside a JAX model: no layout transposes)     #
# --------------------------------------------------------------------------- #
def unet_up_forward_nhwc(x, skip, weight, gamma, beta, eps=1e-5, out_dtype=None):
    """x: (N,H,W,Cin), skip: (N,2H,2W,Cskip), weight: (Cin,Cout,4,4) torch layout.

    Returns (N, 2H, 2W, Cout + Cskip).  out_dtype defaults to skip.dtype (pass bf16
    inputs / bf16 out_dtype for the memory-bandwidth-optimal path)."""
    N, H, W, Cin = x.shape
    Cout = weight.shape[1]
    Cskip = skip.shape[-1]
    Ho, Wo = 2 * H, 2 * W
    Ctot = Cout + Cskip
    if out_dtype is None:
        out_dtype = skip.dtype
    vmem_limit = _vmem_limit_bytes()

    # --- tiny XLA prep: zero-pad input, K-concatenated bf16 taps -----------------
    xp = jnp.pad(x.astype(jnp.bfloat16), ((0, 0), (1, 1), (1, 1), (0, 0)))
    # out[2m+ph, 2k+pw] += xpad[m+ph+dh, k+pw+dw] @ weight[:, :, 3-ph-2dh, 3-pw-2dw]
    w_cat = jnp.stack([
        jnp.stack([
            jnp.concatenate(
                [weight[:, :, 3 - ph - 2 * dh, 3 - pw - 2 * dw]
                 for dh in (0, 1) for dw in (0, 1)], axis=0)          # (4*Cin, Cout)
            for pw in (0, 1)], axis=0)
        for ph in (0, 1)], axis=0).astype(jnp.bfloat16)               # (2, 2, 4*Cin, Cout)

    # --- Pallas kernel 1: transposed conv + partial BN statistics ----------------
    # TODO(synk): whole-image blocking; very large decoder shapes on v7x (64 MiB VMEM)
    # need a halo-tiled H grid axis here.
    y_phases, stats = pl.pallas_call(
        _convt_phase_kernel,
        grid=(N, 2),
        in_specs=[
            pl.BlockSpec((1, H + 2, W + 2, Cin), lambda n, p: (n, 0, 0, 0)),
            pl.BlockSpec((1, 2, 4 * Cin, Cout), lambda n, p: (p, 0, 0, 0)),
        ],
        out_specs=[
            pl.BlockSpec((1, 2, H, W, Cout), lambda n, p: (n, p, 0, 0, 0)),
            pl.BlockSpec((1, 1, 2, Cout), lambda n, p: (n, p, 0, 0)),
        ],
        out_shape=[
            jax.ShapeDtypeStruct((N, 4, H, W, Cout), jnp.bfloat16),   # phase = ph*2 + pw
            jax.ShapeDtypeStruct((N, 2, 2, Cout), jnp.float32),       # per-(n, ph) partials
        ],
        compiler_params=pltpu.CompilerParams(
            dimension_semantics=("parallel", "parallel"),
            vmem_limit_bytes=vmem_limit),
    )(xp, w_cat)

    # --- fold training-mode BatchNorm into per-channel scale/shift (tiny, XLA) ---
    tot = jnp.sum(stats, axis=(0, 1))                  # (2, Cout)
    cnt = jnp.float32(N * Ho * Wo)
    mean = tot[0] / cnt
    var = tot[1] / cnt - mean * mean                   # biased variance (torch training BN)
    # TODO(synk): nn.BatchNorm2d running_mean/running_var buffer updates are not modeled
    # (they do not affect the forward value in training mode).
    inv_std = jax.lax.rsqrt(var + eps)
    g = gamma.astype(jnp.float32)
    scale = (g * inv_std).reshape(1, 1, Cout)
    shift = (beta.astype(jnp.float32) - mean * g * inv_std).reshape(1, 1, Cout)

    # --- parity reassembly: one XLA relayout pass on the bf16 y -------------------
    # TODO(synk): fusing this (ph, pw) -> dense interleave into kernel 2 requires
    # sublane-strided stores/loads (tpu.strided_store); kept in XLA until that lowering
    # is validated on the target toolchain.  It is the one remaining extra HBM round
    # trip of y (bf16, so half the cost of the previous f32-era pass).
    y = y_phases.reshape(N, 2, 2, H, W, Cout)
    y = jnp.transpose(y, (0, 3, 1, 4, 2, 5)).reshape(N, Ho, Wo, Cout)

    # --- Pallas kernel 2: BN + ReLU + concat (tiled, lane-dense, parallel) --------
    bytes_per_row = Wo * (2 * Cout
                          + jnp.dtype(skip.dtype).itemsize * Cskip
                          + jnp.dtype(out_dtype).itemsize * Ctot)
    block_budget = max(512 * 1024, vmem_limit // 6)     # leaves room for double buffering
    TH = _largest_divisor_at_most(Ho, block_budget // max(1, bytes_per_row))

    out_nhwc = pl.pallas_call(
        _bn_relu_concat_kernel,
        grid=(N, Ho // TH),
        in_specs=[
            pl.BlockSpec((1, TH, Wo, Cout), lambda n, r: (n, r, 0, 0)),
            pl.BlockSpec((1, TH, Wo, Cskip), lambda n, r: (n, r, 0, 0)),
            pl.BlockSpec((1, 1, Cout), lambda n, r: (0, 0, 0)),
            pl.BlockSpec((1, 1, Cout), lambda n, r: (0, 0, 0)),
        ],
        out_specs=pl.BlockSpec((1, TH, Wo, Ctot), lambda n, r: (n, r, 0, 0)),
        out_shape=jax.ShapeDtypeStruct((N, Ho, Wo, Ctot), out_dtype),
        compiler_params=pltpu.CompilerParams(
            dimension_semantics=("parallel", "parallel"),
            vmem_limit_bytes=vmem_limit),
    )(y, skip, scale, shift)
    return out_nhwc


# --------------------------------------------------------------------------- #
# NCHW wrapper (PyTorch-facing; default f32 output matches nn.Module semantics)#
# --------------------------------------------------------------------------- #
def unet_up_forward(x_nchw, skip_nchw, weight, gamma, beta, eps=1e-5,
                    out_dtype=jnp.float32):
    # bf16 cast BEFORE the relayout: halves the HBM traffic of the boundary transpose.
    x = jnp.transpose(x_nchw.astype(jnp.bfloat16), (0, 2, 3, 1))
    skip_dtype = (jnp.bfloat16 if jnp.dtype(out_dtype) == jnp.dtype(jnp.bfloat16)
                  else skip_nchw.dtype)
    skip = jnp.transpose(skip_nchw.astype(skip_dtype), (0, 2, 3, 1))
    out = unet_up_forward_nhwc(x, skip, weight, gamma, beta, eps, out_dtype=out_dtype)
    return jnp.transpose(out, (0, 3, 1, 2))


# ---- pure-JAX reference (verification only) ----------------------------------
def ref_unet_up(x, skip, weight, gamma, beta, eps=1e-5):
    w_flip = weight[:, :, ::-1, ::-1]
    w_oihw = jnp.transpose(w_flip, (1, 0, 2, 3))
    y = jax.lax.conv_general_dilated(
        x, w_oihw, window_strides=(1, 1), padding=((2, 2), (2, 2)),
        lhs_dilation=(2, 2), dimension_numbers=("NCHW", "OIHW", "NCHW"),
        precision=jax.lax.Precision.HIGHEST)
    mean = jnp.mean(y, axis=(0, 2, 3), keepdims=True)
    var = jnp.var(y, axis=(0, 2, 3), keepdims=True)
    yn = (y - mean) * jax.lax.rsqrt(var + eps)
    yn = yn * gamma[None, :, None, None] + beta[None, :, None, None]
    yn = jnp.maximum(yn, 0.0)
    return jnp.concatenate([yn, skip], axis=1)


if __name__ == "__main__":
    N, Cin, Cout, Cskip, H, W = 2, 4, 8, 8, 8, 8

    key = jax.random.PRNGKey(0)
    k1, k2, k3 = jax.random.split(key, 3)
    x = jax.random.normal(k1, (N, Cin, H, W), jnp.float32)
    skip = jax.random.normal(k2, (N, Cskip, 2 * H, 2 * W), jnp.float32)
    weight = jax.random.normal(k3, (Cin, Cout, 4, 4), jnp.float32) * 0.1
    gamma = jnp.ones((Cout,), jnp.float32)        # PyTorch BN defaults
    beta = jnp.zeros((Cout,), jnp.float32)

    ref = ref_unet_up(x, skip, weight, gamma, beta)

    # 1) PyTorch-facing NCHW path, f32 output (module-faithful dtype).
    out = jax.block_until_ready(jax.jit(unet_up_forward)(x, skip, weight, gamma, beta))
    assert out.shape == (N, Cout + Cskip, 2 * H, 2 * W), out.shape
    max_err = float(jnp.max(jnp.abs(out - ref)))
    assert jnp.allclose(out, ref, atol=5e-2, rtol=5e-2), max_err

    # 2) NHWC / bf16 fast path (preferred inside a JAX model; bf16 skip + bf16 out).
    x_nhwc = jnp.transpose(x, (0, 2, 3, 1)).astype(jnp.bfloat16)
    skip_nhwc = jnp.transpose(skip, (0, 2, 3, 1)).astype(jnp.bfloat16)
    out_bf16 = jax.block_until_ready(
        jax.jit(unet_up_forward_nhwc)(x_nhwc, skip_nhwc, weight, gamma, beta))
    ref_nhwc = jnp.transpose(ref, (0, 2, 3, 1))
    assert out_bf16.shape == ref_nhwc.shape, out_bf16.shape
    assert out_bf16.dtype == jnp.bfloat16
    max_err_bf16 = float(jnp.max(jnp.abs(out_bf16.astype(jnp.float32) - ref_nhwc)))
    assert jnp.allclose(out_bf16.astype(jnp.float32), ref_nhwc,
                        atol=1e-1, rtol=1e-1), max_err_bf16

    print("KERNEL_OK")
</pallas_src>

<mosaic_0001>
module attributes {stable_mosaic.version = 11 : i64} {
  func.func @_convt_phase_kernel(%arg0: i32, %arg1: i32, %arg2: memref<1x10x10x4xbf16, #tpu.memory_space<vmem>>, %arg3: memref<1x2x16x8xbf16, #tpu.memory_space<vmem>>, %arg4: memref<1x2x8x8x8xbf16, #tpu.memory_space<vmem>>, %arg5: memref<1x1x2x8xf32, #tpu.memory_space<vmem>>) attributes {dimension_semantics = [#tpu.dimension_semantics<parallel>, #tpu.dimension_semantics<parallel>], iteration_bounds = array<i64: 2, 2>, scalar_prefetch = 0 : i64, scratch_operands = 0 : i64, tpu.core_type = #tpu.core_type<tc>, window_params = [{transform_indices = @transform_0, window_bounds = array<i64: 1, 10, 10, 4>}, {transform_indices = @transform_1, window_bounds = array<i64: 1, 2, 16, 8>}, {transform_indices = @transform_2, window_bounds = array<i64: 1, 2, 8, 8, 8>}, {transform_indices = @transform_3, window_bounds = array<i64: 1, 1, 2, 8>}]} {
    %cst = arith.constant 0.000000e+00 : f32
    %0 = vector.broadcast %cst : f32 to vector<1x8xf32>
    %cst_0 = arith.constant 0.000000e+00 : f32
    %1 = vector.broadcast %cst_0 : f32 to vector<1x8xf32>
    %c0_i32 = arith.constant 0 : i32
    %2 = arith.addi %arg1, %c0_i32 : i32
    %c0 = arith.constant 0 : index
    %3 = arith.index_cast %2 : i32 to index
    %c0_1 = arith.constant 0 : index
    %c0_2 = arith.constant 0 : index
    %4 = vector.load %arg2[%c0, %3, %c0_1, %c0_2] : memref<1x10x10x4xbf16, #tpu.memory_space<vmem>>, vector<1x8x8x4xbf16>
    %5 = vector.shape_cast %4 : vector<1x8x8x4xbf16> to vector<8x8x4xbf16>
    %c0_i32_3 = arith.constant 0 : i32
    %6 = arith.addi %arg1, %c0_i32_3 : i32
    %c0_4 = arith.constant 0 : index
    %7 = arith.index_cast %6 : i32 to index
    %c1 = arith.constant 1 : index
    %c0_5 = arith.constant 0 : index
    %8 = vector.load %arg2[%c0_4, %7, %c1, %c0_5] : memref<1x10x10x4xbf16, #tpu.memory_space<vmem>>, vector<1x8x8x4xbf16>
    %9 = vector.shape_cast %8 : vector<1x8x8x4xbf16> to vector<8x8x4xbf16>
    %c1_i32 = arith.constant 1 : i32
    %10 = arith.addi %arg1, %c1_i32 : i32
    %c0_6 = arith.constant 0 : index
    %11 = arith.index_cast %10 : i32 to index
    %c0_7 = arith.constant 0 : index
    %c0_8 = arith.constant 0 : index
    %12 = vector.load %arg2[%c0_6, %11, %c0_7, %c0_8] : memref<1x10x10x4xbf16, #tpu.memory_space<vmem>>, vector<1x8x8x4xbf16>
    %13 = vector.shape_cast %12 : vector<1x8x8x4xbf16> to vector<8x8x4xbf16>
    %c1_i32_9 = arith.constant 1 : i32
    %14 = arith.addi %arg1, %c1_i32_9 : i32
    %c0_10 = arith.constant 0 : index
    %15 = arith.index_cast %14 : i32 to index
    %c1_11 = arith.constant 1 : index
    %c0_12 = arith.constant 0 : index
    %16 = vector.load %arg2[%c0_10, %15, %c1_11, %c0_12] : memref<1x10x10x4xbf16, #tpu.memory_space<vmem>>, vector<1x8x8x4xbf16>
    %17 = vector.shape_cast %16 : vector<1x8x8x4xbf16> to vector<8x8x4xbf16>
    %18 = tpu.concatenate %5, %9, %13, %17 in 2 : vector<8x8x4xbf16>, vector<8x8x4xbf16>, vector<8x8x4xbf16>, vector<8x8x4xbf16> -> vector<8x8x16xbf16>
    %19 = vector.shape_cast %18 : vector<8x8x16xbf16> to vector<64x16xbf16>
    %c0_13 = arith.constant 0 : index
    %c0_14 = arith.constant 0 : index
    %c0_15 = arith.constant 0 : index
    %c0_16 = arith.constant 0 : index
    %20 = vector.load %arg3[%c0_13, %c0_14, %c0_15, %c0_16] : memref<1x2x16x8xbf16, #tpu.memory_space<vmem>>, vector<1x1x16x8xbf16>
    %21 = vector.shape_cast %20 : vector<1x1x16x8xbf16> to vector<16x8xbf16>
    %cst_17 = arith.constant dense<0.000000e+00> : vector<64x8xf32>
    %22 = tpu.matmul %19, %21, %cst_17 {dimension_numbers = #tpu.dot_dimension_numbers<[1], [0], [0], [1], [0, 0, 1, 1], [], []>} : vector<64x16xbf16>, vector<16x8xbf16>, vector<64x8xf32> -> vector<64x8xf32>
    %cst_18 = arith.constant dense<0.000000e+00> : vector<8xf32>
    %23 = vector.multi_reduction <add>, %22, %cst_18 [0] : vector<64x8xf32> to vector<8xf32>
    %24 = vector.shape_cast %23 : vector<8xf32> to vector<1x8xf32>
    %25 = arith.addf %0, %24 : vector<1x8xf32>
    %26 = arith.mulf %22, %22 : vector<64x8xf32>
    %cst_19 = arith.constant dense<0.000000e+00> : vector<8xf32>
    %27 = vector.multi_reduction <add>, %26, %cst_19 [0] : vector<64x8xf32> to vector<8xf32>
    %28 = vector.shape_cast %27 : vector<8xf32> to vector<1x8xf32>
    %29 = arith.addf %1, %28 : vector<1x8xf32>
    %30 = vector.shape_cast %22 : vector<64x8xf32> to vector<8x8x8xf32>
    %31 = arith.truncf %30 : vector<8x8x8xf32> to vector<8x8x8xbf16>
    %c0_20 = arith.constant 0 : index
    %c0_21 = arith.constant 0 : index
    %c0_22 = arith.constant 0 : index
    %c0_23 = arith.constant 0 : index
    %c0_24 = arith.constant 0 : index
    %32 = vector.load %arg4[%c0_20, %c0_21, %c0_22, %c0_23, %c0_24] : memref<1x2x8x8x8xbf16, #tpu.memory_space<vmem>>, vector<1x1x8x8x8xbf16>
    %33 = vector.shape_cast %32 : vector<1x1x8x8x8xbf16> to vector<8x8x8xbf16>
    %34 = vector.shape_cast %31 : vector<8x8x8xbf16> to vector<1x1x8x8x8xbf16>
    tpu.vector_store %arg4[%c0_20, %c0_21, %c0_22, %c0_23, %c0_24], %34 {strides = array<i32>} : memref<1x2x8x8x8xbf16, #tpu.memory_space<vmem>>, vector<1x1x8x8x8xbf16>,
    %c0_i32_25 = arith.constant 0 : i32
    %35 = arith.addi %arg1, %c0_i32_25 : i32
    %c0_26 = arith.constant 0 : index
    %36 = arith.index_cast %35 : i32 to index
    %c1_27 = arith.constant 1 : index
    %c0_28 = arith.constant 0 : index
    %37 = vector.load %arg2[%c0_26, %36, %c1_27, %c0_28] : memref<1x10x10x4xbf16, #tpu.memory_space<vmem>>, vector<1x8x8x4xbf16>
    %38 = vector.shape_cast %37 : vector<1x8x8x4xbf16> to vector<8x8x4xbf16>
    %c0_i32_29 = arith.constant 0 : i32
    %39 = arith.addi %arg1, %c0_i32_29 : i32
    %c0_30 = arith.constant 0 : index
    %40 = arith.index_cast %39 : i32 to index
    %c2 = arith.constant 2 : index
    %c0_31 = arith.constant 0 : index
    %41 = vector.load %arg2[%c0_30, %40, %c2, %c0_31] : memref<1x10x10x4xbf16, #tpu.memory_space<vmem>>, vector<1x8x8x4xbf16>
    %42 = vector.shape_cast %41 : vector<1x8x8x4xbf16> to vector<8x8x4xbf16>
    %c1_i32_32 = arith.constant 1 : i32
    %43 = arith.addi %arg1, %c1_i32_32 : i32
    %c0_33 = arith.constant 0 : index
    %44 = arith.index_cast %43 : i32 to index
    %c1_34 = arith.constant 1 : index
    %c0_35 = arith.constant 0 : index
    %45 = vector.load %arg2[%c0_33, %44, %c1_34, %c0_35] : memref<1x10x10x4xbf16, #tpu.memory_space<vmem>>, vector<1x8x8x4xbf16>
    %46 = vector.shape_cast %45 : vector<1x8x8x4xbf16> to vector<8x8x4xbf16>
    %c1_i32_36 = arith.constant 1 : i32
    %47 = arith.addi %arg1, %c1_i32_36 : i32
    %c0_37 = arith.constant 0 : index
    %48 = arith.index_cast %47 : i32 to index
    %c2_38 = arith.constant 2 : index
    %c0_39 = arith.constant 0 : index
    %49 = vector.load %arg2[%c0_37, %48, %c2_38, %c0_39] : memref<1x10x10x4xbf16, #tpu.memory_space<vmem>>, vector<1x8x8x4xbf16>
    %50 = vector.shape_cast %49 : vector<1x8x8x4xbf16> to vector<8x8x4xbf16>
    %51 = tpu.concatenate %38, %42, %46, %50 in 2 : vector<8x8x4xbf16>, vector<8x8x4xbf16>, vector<8x8x4xbf16>, vector<8x8x4xbf16> -> vector<8x8x16xbf16>
    %52 = vector.shape_cast %51 : vector<8x8x16xbf16> to vector<64x16xbf16>
    %c0_40 = arith.constant 0 : index
    %c1_41 = arith.constant 1 : index
    %c0_42 = arith.constant 0 : index
    %c0_43 = arith.constant 0 : index
    %53 = vector.load %arg3[%c0_40, %c1_41, %c0_42, %c0_43] : memref<1x2x16x8xbf16, #tpu.memory_space<vmem>>, vector<1x1x16x8xbf16>
    %54 = vector.shape_cast %53 : vector<1x1x16x8xbf16> to vector<16x8xbf16>
    %cst_44 = arith.constant dense<0.000000e+00> : vector<64x8xf32>
    %55 = tpu.matmul %52, %54, %cst_44 {dimension_numbers = #tpu.dot_dimension_numbers<[1], [0], [0], [1], [0, 0, 1, 1], [], []>} : vector<64x16xbf16>, vector<16x8xbf16>, vector<64x8xf32> -> vector<64x8xf32>
    %cst_45 = arith.constant dense<0.000000e+00> : vector<8xf32>
    %56 = vector.multi_reduction <add>, %55, %cst_45 [0] : vector<64x8xf32> to vector<8xf32>
    %57 = vector.shape_cast %56 : vector<8xf32> to vector<1x8xf32>
    %58 = arith.addf %25, %57 : vector<1x8xf32>
    %59 = arith.mulf %55, %55 : vector<64x8xf32>
    %cst_46 = arith.constant dense<0.000000e+00> : vector<8xf32>
    %60 = vector.multi_reduction <add>, %59, %cst_46 [0] : vector<64x8xf32> to vector<8xf32>
    %61 = vector.shape_cast %60 : vector<8xf32> to vector<1x8xf32>
    %62 = arith.addf %29, %61 : vector<1x8xf32>
    %63 = vector.shape_cast %55 : vector<64x8xf32> to vector<8x8x8xf32>
    %64 = arith.truncf %63 : vector<8x8x8xf32> to vector<8x8x8xbf16>
    %c0_47 = arith.constant 0 : index
    %c1_48 = arith.constant 1 : index
    %c0_49 = arith.constant 0 : index
    %c0_50 = arith.constant 0 : index
    %c0_51 = arith.constant 0 : index
    %65 = vector.load %arg4[%c0_47, %c1_48, %c0_49, %c0_50, %c0_51] : memref<1x2x8x8x8xbf16, #tpu.memory_space<vmem>>, vector<1x1x8x8x8xbf16>
    %66 = vector.shape_cast %65 : vector<1x1x8x8x8xbf16> to vector<8x8x8xbf16>
    %67 = vector.shape_cast %64 : vector<8x8x8xbf16> to vector<1x1x8x8x8xbf16>
    tpu.vector_store %arg4[%c0_47, %c1_48, %c0_49, %c0_50, %c0_51], %67 {strides = array<i32>} : memref<1x2x8x8x8xbf16, #tpu.memory_space<vmem>>, vector<1x1x8x8x8xbf16>,
    %68 = tpu.concatenate %58, %62 in 0 : vector<1x8xf32>, vector<1x8xf32> -> vector<2x8xf32>
    %c0_52 = arith.constant 0 : index
    %c0_53 = arith.constant 0 : index
    %c0_54 = arith.constant 0 : index
    %c0_55 = arith.constant 0 : index
    %69 = vector.load %arg5[%c0_52, %c0_53, %c0_54, %c0_55] : memref<1x1x2x8xf32, #tpu.memory_space<vmem>>, vector<1x1x2x8xf32>
    %70 = vector.shape_cast %69 : vector<1x1x2x8xf32> to vector<2x8xf32>
    %71 = vector.shape_cast %68 : vector<2x8xf32> to vector<1x1x2x8xf32>
    tpu.vector_store %arg5[%c0_52, %c0_53, %c0_54, %c0_55], %71 {strides = array<i32>} : memref<1x1x2x8xf32, #tpu.memory_space<vmem>>, vector<1x1x2x8xf32>,
    return
  }
  func.func @transform_0(%arg0: i32, %arg1: i32) -> (i32, i32, i32, i32) {
    %c0_i32 = arith.constant 0 : i32
    %c0_i32_0 = arith.constant 0 : i32
    %c0_i32_1 = arith.constant 0 : i32
    %c0_i32_2 = arith.constant 0 : i32
    return %arg0, %c0_i32, %c0_i32_0, %c0_i32_1 : i32, i32, i32, i32
  }
  func.func @transform_1(%arg0: i32, %arg1: i32) -> (i32, i32, i32, i32) {
    %c0_i32 = arith.constant 0 : i32
    %c0_i32_0 = arith.constant 0 : i32
    %c0_i32_1 = arith.constant 0 : i32
    %c0_i32_2 = arith.constant 0 : i32
    return %arg1, %c0_i32, %c0_i32_0, %c0_i32_1 : i32, i32, i32, i32
  }
  func.func @transform_2(%arg0: i32, %arg1: i32) -> (i32, i32, i32, i32, i32) {
    %c0_i32 = arith.constant 0 : i32
    %c0_i32_0 = arith.constant 0 : i32
    %c0_i32_1 = arith.constant 0 : i32
    %c0_i32_2 = arith.constant 0 : i32
    return %arg0, %arg1, %c0_i32, %c0_i32_0, %c0_i32_1 : i32, i32, i32, i32, i32
  }
  func.func @transform_3(%arg0: i32, %arg1: i32) -> (i32, i32, i32, i32) {
    %c0_i32 = arith.constant 0 : i32
    %c0_i32_0 = arith.constant 0 : i32
    %c0_i32_1 = arith.constant 0 : i32
    return %arg0, %arg1, %c0_i32, %c0_i32_0 : i32, i32, i32, i32
  }
}

module attributes {stable_mosaic.version = 11 : i64} {
  func.func @_bn_relu_concat_kernel(%arg0: i32, %arg1: i32, %arg2: memref<1x16x16x8xbf16, #tpu.memory_space<vmem>>, %arg3: memref<1x16x16x8xf32, #tpu.memory_space<vmem>>, %arg4: memref<1x1x8xf32, #tpu.memory_space<vmem>>, %arg5: memref<1x1x8xf32, #tpu.memory_space<vmem>>, %arg6: memref<1x16x16x16xf32, #tpu.memory_space<vmem>>) attributes {dimension_semantics = [#tpu.dimension_semantics<parallel>, #tpu.dimension_semantics<parallel>], iteration_bounds = array<i64: 2, 1>, scalar_prefetch = 0 : i64, scratch_operands = 0 : i64, tpu.core_type = #tpu.core_type<tc>, window_params = [{transform_indices = @transform_0, window_bounds = array<i64: 1, 16, 16, 8>}, {transform_indices = @transform_1, window_bounds = array<i64: 1, 16, 16, 8>}, {pipeline_mode = #tpu.pipeline_mode<synchronous>, transform_indices = @transform_2, window_bounds = array<i64: 1, 1, 8>}, {pipeline_mode = #tpu.pipeline_mode<synchronous>, transform_indices = @transform_3, window_bounds = array<i64: 1, 1, 8>}, {transform_indices = @transform_4, window_bounds = array<i64: 1, 16, 16, 16>}]} {
    %c0 = arith.constant 0 : index
    %c0_0 = arith.constant 0 : index
    %c0_1 = arith.constant 0 : index
    %c0_2 = arith.constant 0 : index
    %0 = vector.load %arg2[%c0, %c0_0, %c0_1, %c0_2] : memref<1x16x16x8xbf16, #tpu.memory_space<vmem>>, vector<1x16x16x8xbf16>
    %1 = vector.shape_cast %0 : vector<1x16x16x8xbf16> to vector<16x16x8xbf16>
    %2 = arith.extf %1 : vector<16x16x8xbf16> to vector<16x16x8xf32>
    %c0_3 = arith.constant 0 : index
    %c0_4 = arith.constant 0 : index
    %c0_5 = arith.constant 0 : index
    %3 = vector.load %arg4[%c0_3, %c0_4, %c0_5] : memref<1x1x8xf32, #tpu.memory_space<vmem>>, vector<1x1x8xf32>
    %4 = vector.shape_cast %3 : vector<1x1x8xf32> to vector<1x8xf32>
    %5 = vector.shape_cast %4 : vector<1x8xf32> to vector<1x1x8xf32>
    %6 = vector.broadcast %5 : vector<1x1x8xf32> to vector<16x16x8xf32>
    %7 = arith.mulf %2, %6 : vector<16x16x8xf32>
    %c0_6 = arith.constant 0 : index
    %c0_7 = arith.constant 0 : index
    %c0_8 = arith.constant 0 : index
    %8 = vector.load %arg5[%c0_6, %c0_7, %c0_8] : memref<1x1x8xf32, #tpu.memory_space<vmem>>, vector<1x1x8xf32>
    %9 = vector.shape_cast %8 : vector<1x1x8xf32> to vector<1x8xf32>
    %10 = vector.shape_cast %9 : vector<1x8xf32> to vector<1x1x8xf32>
    %11 = vector.broadcast %10 : vector<1x1x8xf32> to vector<16x16x8xf32>
    %12 = arith.addf %7, %11 : vector<16x16x8xf32>
    %cst = arith.constant 0.000000e+00 : f32
    %13 = vector.broadcast %cst : f32 to vector<16x16x8xf32>
    %14 = arith.maximumf %12, %13 : vector<16x16x8xf32>
    %c0_9 = arith.constant 0 : index
    %c0_10 = arith.constant 0 : index
    %c0_11 = arith.constant 0 : index
    %c0_12 = arith.constant 0 : index
    %15 = vector.load %arg6[%c0_9, %c0_10, %c0_11, %c0_12] : memref<1x16x16x16xf32, #tpu.memory_space<vmem>>, vector<1x16x16x8xf32>
    %16 = vector.shape_cast %15 : vector<1x16x16x8xf32> to vector<16x16x8xf32>
    %17 = vector.shape_cast %14 : vector<16x16x8xf32> to vector<1x16x16x8xf32>
    tpu.vector_store %arg6[%c0_9, %c0_10, %c0_11, %c0_12], %17 {strides = array<i32>} : memref<1x16x16x16xf32, #tpu.memory_space<vmem>>, vector<1x16x16x8xf32>,
    %c0_13 = arith.constant 0 : index
    %c0_14 = arith.constant 0 : index
    %c0_15 = arith.constant 0 : index
    %c0_16 = arith.constant 0 : index
    %18 = vector.load %arg3[%c0_13, %c0_14, %c0_15, %c0_16] : memref<1x16x16x8xf32, #tpu.memory_space<vmem>>, vector<1x16x16x8xf32>
    %19 = vector.shape_cast %18 : vector<1x16x16x8xf32> to vector<16x16x8xf32>
    %c0_17 = arith.constant 0 : index
    %c0_18 = arith.constant 0 : index
    %c0_19 = arith.constant 0 : index
    %c8 = arith.constant 8 : index
    %20 = vector.load %arg6[%c0_17, %c0_18, %c0_19, %c8] : memref<1x16x16x16xf32, #tpu.memory_space<vmem>>, vector<1x16x16x8xf32>
    %21 = vector.shape_cast %20 : vector<1x16x16x8xf32> to vector<16x16x8xf32>
    %22 = vector.shape_cast %19 : vector<16x16x8xf32> to vector<1x16x16x8xf32>
    tpu.vector_store %arg6[%c0_17, %c0_18, %c0_19, %c8], %22 {strides = array<i32>} : memref<1x16x16x16xf32, #tpu.memory_space<vmem>>, vector<1x16x16x8xf32>,
    return
  }
  func.func @transform_0(%arg0: i32, %arg1: i32) -> (i32, i32, i32, i32) {
    %c0_i32 = arith.constant 0 : i32
    %c0_i32_0 = arith.constant 0 : i32
    %c0_i32_1 = arith.constant 0 : i32
    return %arg0, %arg1, %c0_i32, %c0_i32_0 : i32, i32, i32, i32
  }
  func.func @transform_1(%arg0: i32, %arg1: i32) -> (i32, i32, i32, i32) {
    %c0_i32 = arith.constant 0 : i32
    %c0_i32_0 = arith.constant 0 : i32
    %c0_i32_1 = arith.constant 0 : i32
    return %arg0, %arg1, %c0_i32, %c0_i32_0 : i32, i32, i32, i32
  }
  func.func @transform_2(%arg0: i32, %arg1: i32) -> (i32, i32, i32) {
    %c0_i32 = arith.constant 0 : i32
    %c0_i32_0 = arith.constant 0 : i32
    %c0_i32_1 = arith.constant 0 : i32
    %c0_i32_2 = arith.constant 0 : i32
    return %c0_i32, %c0_i32_0, %c0_i32_1 : i32, i32, i32
  }
  func.func @transform_3(%arg0: i32, %arg1: i32) -> (i32, i32, i32) {
    %c0_i32 = arith.constant 0 : i32
    %c0_i32_0 = arith.constant 0 : i32
    %c0_i32_1 = arith.constant 0 : i32
    %c0_i32_2 = arith.constant 0 : i32
    return %c0_i32, %c0_i32_0, %c0_i32_1 : i32, i32, i32
  }
  func.func @transform_4(%arg0: i32, %arg1: i32) -> (i32, i32, i32, i32) {
    %c0_i32 = arith.constant 0 : i32
    %c0_i32_0 = arith.constant 0 : i32
    %c0_i32_1 = arith.constant 0 : i32
    return %arg0, %arg1, %c0_i32, %c0_i32_0 : i32, i32, i32, i32
  }
}

</mosaic_0001>

<llo_original>
// kernel: unet_up_forward.3
$region0: #{unet_up_forward.3}
  #allocation0 [shape = 'u32[]', space=smem, size = 0x4, offset = 0x4, fixed_abs, tag = 'smem constant byte address 0x4 - core index']
  #allocation1 [shape = 'u32[144,128]{1,0:T(1,128)}', space=vmem, size = 0x12000, scoped, tag = 'internal scratch']
  %s0 = inlined_call_operand.vmem [shape: bf16[2,16,16,8], index: 0, kind: input, shape index: {}]
  %s1 = inlined_call_operand.vmem [shape: f32[2,16,16,8], index: 1, kind: input, shape index: {}]
  %s2 = inlined_call_operand.vmem [shape: f32[1,1,8], index: 2, kind: input, shape index: {}]
  %s3 = inlined_call_operand.vmem [shape: f32[1,1,8], index: 3, kind: input, shape index: {}]
  %s4 = inlined_call_operand.vmem [shape: f32[2,16,16,16], index: 4, kind: output, shape index: {}]
  %s5 = sld [smem:[#allocation0]]
  $region49: #{unet_up_forward.3} parent=0
    _
  %s7 = ssub.s32 1, %s5
  %s8 = scalar_select 0, %s7, %s5
  loop: start=0, step=1, limit=4
  $region2: #{unet_up_forward.3} parent=0 // loop_pre_header
    _
  $region3: #{unet_up_forward.3} parent=0 // loop_header
    %s10 = sphi 0, %s14
    %p11 = scmp.ge.s32.totalorder %s10, 4
    %s17 = sphi 0, %s29
    %s18 = sphi 0, %s25
    %s19 = sphi 0, %s17
    %s20 = sphi 0, %s18
    %s21 = sphi 0, %s19
    %s22 = sphi 0, %s20
    %s34 = sphi 0, %s36
    %s37 = sphi 0, %s34
    %s38 = sphi 0, %s37
    %s54 = sphi 0, %s38
    %s62 = sphi 0, %s64
    %s65 = sphi 0, %s62
    %s66 = sphi 0, %s65
    %s82 = sphi 0, %s66
    %s86 = sphi 0, %s86
    %s88 = sphi 0, %s86
    %s89 = sphi 0, %s88
    %s103 = sphi 0, %s89
    %s107 = sphi 0, %s107
    %s109 = sphi 0, %s107
    %s110 = sphi 0, %s109
    %s124 = sphi 0, %s110
    %s132 = sphi 0, %s134
    %s135 = sphi 0, %s132
    %s136 = sphi 0, %s135
    %s152 = sphi 0, %s136
  $region4: #{unet_up_forward.3} parent=0 // loop_header_branch
    %13 = sbr.rel (%p11) target = $region8
  $region5: #{unet_up_forward.3} parent=0 // loop_body
    %s15 = ssub.s32 %s10, 1
    %s16 = ssub.s32 %s10, 2
    %s23 = sadd.s32 1, %s18
    %p24 = scmp.ge.s32.totalorder %s23, 1
    %s25 = scalar_select %p24, 0, %s23
    %s26 = sadd.s32 1, %s17
    %s27 = scalar_select %p24, %s26, %s17
    %p28 = scmp.ge.s32.totalorder %s27, 2
    %s29 = scalar_select %p28, 0, %s27
    %s30 = ssub.s32 %s17, %s29
    %s31 = ssub.s32 %s18, %s25
    %s32 = sor.u32 %s30, %s31
    %p33 = scmp.eq.s32.totalorder %s32, 0
    %s35 = sadd.s32 %s34, 1
    %s36 = scalar_select %p33, %s34, %s35
    %p39 = pneg %p33
    %p40 = scmp.eq.s32.totalorder %s10, 1
    %p41 = por %p39, %p40
    %p42 = scmp.ne.s32.totalorder %s34, %s37
    %p43 = scmp.eq.s32.totalorder %s10, 0
    %p44 = por %p42, %p43
    %p45 = scmp.ne.s32.totalorder %s34, %s37
    %p46 = scmp.eq.s32.totalorder %s15, 1
    %p47 = por %p45, %p46
    %p48 = scmp.ne.s32.totalorder %s37, %s38
    %p49 = scmp.eq.s32.totalorder %s15, 0
    %p50 = por %p48, %p49
    %p51 = scmp.ne.s32.totalorder %s37, %s38
    %p52 = scmp.eq.s32.totalorder %s16, 1
    %p53 = por %p51, %p52
    %p55 = scmp.ne.s32.totalorder %s38, %s54
    %p56 = scmp.eq.s32.totalorder %s16, 0
    %p57 = por %p55, %p56
    %s58 = ssub.s32 %s17, %s29
    %s59 = ssub.s32 %s18, %s25
    %s60 = sor.u32 %s58, %s59
    %p61 = scmp.eq.s32.totalorder %s60, 0
    %s63 = sadd.s32 %s62, 1
    %s64 = scalar_select %p61, %s62, %s63
    %p67 = pneg %p61
    %p68 = scmp.eq.s32.totalorder %s10, 1
    %p69 = por %p67, %p68
    %p70 = scmp.ne.s32.totalorder %s62, %s65
    %p71 = scmp.eq.s32.totalorder %s10, 0
    %p72 = por %p70, %p71
    %p73 = scmp.ne.s32.totalorder %s62, %s65
    %p74 = scmp.eq.s32.totalorder %s15, 1
    %p75 = por %p73, %p74
    %p76 = scmp.ne.s32.totalorder %s65, %s66
    %p77 = scmp.eq.s32.totalorder %s15, 0
    %p78 = por %p76, %p77
    %p79 = scmp.ne.s32.totalorder %s65, %s66
    %p80 = scmp.eq.s32.totalorder %s16, 1
    %p81 = por %p79, %p80
    %p83 = scmp.ne.s32.totalorder %s66, %s82
    %p84 = scmp.eq.s32.totalorder %s16, 0
    %p85 = por %p83, %p84
    %s87 = sadd.s32 %s86, 1
    %p90 = scmp.eq.s32.totalorder %s10, 1
    %p91 = scmp.ne.s32.totalorder %s86, %s88
    %p92 = scmp.eq.s32.totalorder %s10, 0
    %p93 = por %p91, %p92
    %p94 = scmp.ne.s32.totalorder %s86, %s88
    %p95 = scmp.eq.s32.totalorder %s15, 1
    %p96 = por %p94, %p95
    %p97 = scmp.ne.s32.totalorder %s88, %s89
    %p98 = scmp.eq.s32.totalorder %s15, 0
    %p99 = por %p97, %p98
    %p100 = scmp.ne.s32.totalorder %s88, %s89
    %p101 = scmp.eq.s32.totalorder %s16, 1
    %p102 = por %p100, %p101
    %p104 = scmp.ne.s32.totalorder %s89, %s103
    %p105 = scmp.eq.s32.totalorder %s16, 0
    %p106 = por %p104, %p105
    %s108 = sadd.s32 %s107, 1
    %p111 = scmp.eq.s32.totalorder %s10, 1
    %p112 = scmp.ne.s32.totalorder %s107, %s109
    %p113 = scmp.eq.s32.totalorder %s10, 0
    %p114 = por %p112, %p113
    %p115 = scmp.ne.s32.totalorder %s107, %s109
    %p116 = scmp.eq.s32.totalorder %s15, 1
    %p117 = por %p115, %p116
    %p118 = scmp.ne.s32.totalorder %s109, %s110
    %p119 = scmp.eq.s32.totalorder %s15, 0
    %p120 = por %p118, %p119
    %p121 = scmp.ne.s32.totalorder %s109, %s110
    %p122 = scmp.eq.s32.totalorder %s16, 1
    %p123 = por %p121, %p122
    %p125 = scmp.ne.s32.totalorder %s110, %s124
    %p126 = scmp.eq.s32.totalorder %s16, 0
    %p127 = por %p125, %p126
    %s128 = ssub.s32 %s17, %s29
    %s129 = ssub.s32 %s18, %s25
    %s130 = sor.u32 %s128, %s129
    %p131 = scmp.eq.s32.totalorder %s130, 0
    %s133 = sadd.s32 %s132, 1
    %s134 = scalar_select %p131, %s132, %s133
    %p137 = pneg %p131
    %p138 = scmp.eq.s32.totalorder %s10, 1
    %p139 = por %p137, %p138
    %p140 = scmp.ne.s32.totalorder %s132, %s135
    %p141 = scmp.eq.s32.totalorder %s10, 0
    %p142 = por %p140, %p141
    %p143 = scmp.ne.s32.totalorder %s132, %s135
    %p144 = scmp.eq.s32.totalorder %s15, 1
    %p145 = por %p143, %p144
    %p146 = scmp.ne.s32.totalorder %s135, %s136
    %p147 = scmp.eq.s32.totalorder %s15, 0
    %p148 = por %p146, %p147
    %p149 = scmp.ne.s32.totalorder %s135, %s136
    %p150 = scmp.eq.s32.totalorder %s16, 1
    %p151 = por %p149, %p150
    %p153 = scmp.ne.s32.totalorder %s136, %s152
    %p154 = scmp.eq.s32.totalorder %s16, 0
    %p155 = por %p153, %p154
    %p156 = scmp.le.s32.totalorder 1, %s10
    %p157 = scmp.lt.s32.totalorder %s10, 3
    %p158 = pnand %p156, %p157
    %p159 = pneg %p158
    // Predicated region
    $region9: #{unet_up_forward.3} parent=5 // pred_check
      _
    $region10: #{unet_up_forward.3} parent=5 // pred_check_branch
      %161 = sbr.rel (%p158) target = $region12
    $region11: #{unet_up_forward.3} parent=5 // pred_region
      %s162 = ssub.s32 %s10, 1
      // Predicated region
      $region13: #{unet_up_forward.3} parent=11 // pred_check
        %p163 = pneg %p99
      $region14: #{unet_up_forward.3} parent=11 // pred_check_branch
        %165 = sbr.rel (%p163) target = $region16
      $region15: #{unet_up_forward.3} parent=11 // pred_region
        _
      $region16: #{unet_up_forward.3} parent=11 // pred_fallthru
        _
      // Predicated region
      $region17: #{unet_up_forward.3} parent=11 // pred_check
        %p166 = pneg %p120
      $region18: #{unet_up_forward.3} parent=11 // pred_check_branch
        %168 = sbr.rel (%p166) target = $region20
      $region19: #{unet_up_forward.3} parent=11 // pred_region
        _
      $region20: #{unet_up_forward.3} parent=11 // pred_fallthru
        _
    $region12: #{unet_up_forward.3} parent=5 // pred_fallthru
      _
    %p169 = scmp.lt.s32.totalorder %s10, 2
    // Predicated region
    $region21: #{unet_up_forward.3} parent=5 // pred_check
      %p170 = pneg %p169
    $region22: #{unet_up_forward.3} parent=5 // pred_check_branch
      %172 = sbr.rel (%p170) target = $region24
    $region23: #{unet_up_forward.3} parent=5 // pred_region
      // Predicated region
      $region25: #{unet_up_forward.3} parent=23 // pred_check
        %p173 = pneg %p44
      $region26: #{unet_up_forward.3} parent=23 // pred_check_branch
        %175 = sbr.rel (%p173) target = $region28
      $region27: #{unet_up_forward.3} parent=23 // pred_region
        %s176 = smul.u32 16, %s18
        %p177 = scmp.lt.s32.totalorder %s17, 1
        %s178 = scalar_select %p177, %s17, 1
        %p179 = scmp.lt.s32.totalorder %s176, 15
        %s180 = scalar_select %p179, %s176, 15
        %s181 = smul.addr %s180, 2
        %s182 = smul.addr %s178, 32
        %s183 = sadd.s32 %s181, %s182
        %s184 = smul.addr %s183, 4
        %s185 = scalar_lea.vmem %s0, %s184
        %s186 = smul.u32 16, %s18
      $region28: #{unet_up_forward.3} parent=23 // pred_fallthru
        _
      // Predicated region
      $region29: #{unet_up_forward.3} parent=23 // pred_check
        %p187 = pneg %p72
      $region30: #{unet_up_forward.3} parent=23 // pred_check_branch
        %189 = sbr.rel (%p187) target = $region32
      $region31: #{unet_up_forward.3} parent=23 // pred_region
        %s190 = smul.u32 16, %s18
        %p191 = scmp.lt.s32.totalorder %s17, 1
        %s192 = scalar_select %p191, %s17, 1
        %p193 = scmp.lt.s32.totalorder %s190, 15
        %s194 = scalar_select %p193, %s190, 15
        %s195 = smul.addr %s194, 2
        %s196 = smul.addr %s192, 32
        %s197 = sadd.s32 %s195, %s196
        %s198 = smul.addr %s197, 8
        %s199 = scalar_lea.vmem %s1, %s198
        %s200 = smul.u32 16, %s18
      $region32: #{unet_up_forward.3} parent=23 // pred_fallthru
        _
    $region24: #{unet_up_forward.3} parent=5 // pred_fallthru
      _
    %p201 = scmp.le.s32.totalorder 1, %s10
    %p202 = scmp.lt.s32.totalorder %s10, 3
    %p203 = pnand %p201, %p202
    %p204 = pneg %p203
    // Predicated region
    $region33: #{unet_up_forward.3} parent=5 // pred_check
      _
    $region34: #{unet_up_forward.3} parent=5 // pred_check_branch
      %206 = sbr.rel (%p203) target = $region36
    $region35: #{unet_up_forward.3} parent=5 // pred_region
      %s207 = ssub.s32 %s10, 1
      %s208 = smul.u32 16, %s20
      %p209 = scmp.lt.s32.totalorder %s19, 1
      %s210 = scalar_select %p209, %s19, 1
      %p211 = scmp.lt.s32.totalorder %s208, 15
      %s212 = scalar_select %p211, %s208, 15
      %s213 = smul.addr %s212, 2
      %s214 = smul.addr %s210, 32
      %s215 = sadd.s32 %s213, %s214
      %s216 = smul.addr %s215, 4
      %s217 = scalar_lea.vmem %s0, %s216
      %p218 = pneg %p50
      %p219 = pneg %p47
      %s220 = smul.u32 16, %s20
      %p221 = scmp.lt.s32.totalorder %s19, 1
      %s222 = scalar_select %p221, %s19, 1
      %p223 = scmp.lt.s32.totalorder %s220, 15
      %s224 = scalar_select %p223, %s220, 15
      %s225 = smul.addr %s224, 2
      %s226 = smul.addr %s222, 32
      %s227 = sadd.s32 %s225, %s226
      %s228 = smul.addr %s227, 8
      %s229 = scalar_lea.vmem %s1, %s228
      %p230 = pneg %p78
      %p231 = pneg %p75
      %p232 = pneg %p99
      %p233 = pneg %p96
      %p234 = pneg %p120
      %p235 = pneg %p117
      %p236 = pneg %p148
      %p237 = pneg %p145
      %s238 = smul.u32 16, %s20
      %p239 = scmp.lt.s32.totalorder %s19, 1
      %s240 = scalar_select %p239, %s19, 1
      %p241 = scmp.lt.s32.totalorder %s238, 15
      %s242 = scalar_select %p241, %s238, 15
      %s243 = smul.addr %s242, 2
      %s244 = smul.addr %s240, 32
      %s245 = sadd.s32 %s243, %s244
      %s246 = smul.addr %s245, 8
      %s247 = scalar_lea.vmem %s4, %s246
      %s248 = smul.u32 16, %s20
      %p249 = scmp.lt.s32.totalorder %s19, 1
      %s250 = scalar_select %p249, %s19, 1
      %p251 = scmp.lt.s32.totalorder %s248, 15
      %s252 = scalar_select %p251, %s248, 15
      %s253 = smul.addr %s252, 2
      %s254 = smul.addr %s250, 32
      %s255 = sadd.s32 %s253, %s254
      %s256 = smul.addr %s255, 4
      %s257 = scalar_lea.vmem %s0, %s256
      %s258 = smul.u32 16, %s20
      %s259 = smul.u32 16, %s20
      %p260 = scmp.lt.s32.totalorder %s19, 1
      %s261 = scalar_select %p260, %s19, 1
      %p262 = scmp.lt.s32.totalorder %s259, 15
      %s263 = scalar_select %p262, %s259, 15
      %s264 = smul.addr %s263, 2
      %s265 = smul.addr %s261, 32
      %s266 = sadd.s32 %s264, %s265
      %s267 = smul.addr %s266, 8
      %s268 = scalar_lea.vmem %s1, %s267
      %s269 = smul.u32 16, %s20
      %s270 = smul.u32 16, %s20
      %p271 = scmp.lt.s32.totalorder %s19, 1
      %s272 = scalar_select %p271, %s19, 1
      %p273 = scmp.lt.s32.totalorder %s270, 15
      %s274 = scalar_select %p273, %s270, 15
      %s275 = smul.addr %s274, 2
      %s276 = smul.addr %s272, 32
      %s277 = sadd.s32 %s275, %s276
      %s278 = smul.addr %s277, 8
      %s279 = scalar_lea.vmem %s4, %s278
      %s280 = smul.u32 16, %s20
      %v281 = vld [vmem:[%s257] sm:$0xf]
      %v282 = vld [vmem:[%s257 + $0x4] sm:$0xf]
      %v283 = vld [vmem:[%s257 + $0x8] sm:$0xf]
      %v284 = vld [vmem:[%s257 + $0xc] sm:$0xf]
      %v285 = vld [vmem:[%s257 + $0x10] sm:$0xf]
      %v286 = vld [vmem:[%s257 + $0x14] sm:$0xf]
      %v287 = vld [vmem:[%s257 + $0x18] sm:$0xf]
      %v288 = vld [vmem:[%s257 + $0x1c] sm:$0xf]
      %v289 = vld [vmem:[%s257 + $0x20] sm:$0xf]
      %v290 = vld [vmem:[%s257 + $0x24] sm:$0xf]
      %v291 = vld [vmem:[%s257 + $0x28] sm:$0xf]
      %v292 = vld [vmem:[%s257 + $0x2c] sm:$0xf]
      %v293 = vld [vmem:[%s257 + $0x30] sm:$0xf]
      %v294 = vld [vmem:[%s257 + $0x34] sm:$0xf]
      %v295 = vld [vmem:[%s257 + $0x38] sm:$0xf]
      %v296 = vld [vmem:[%s257 + $0x3c] sm:$0xf]
      %v297 = vld [vmem:[%s257 + $0x40] sm:$0xf]
      %v298 = vld [vmem:[%s257 + $0x44] sm:$0xf]
      %v299 = vld [vmem:[%s257 + $0x48] sm:$0xf]
      %v300 = vld [vmem:[%s257 + $0x4c] sm:$0xf]
      %v301 = vld [vmem:[%s257 + $0x50] sm:$0xf]
      %v302 = vld [vmem:[%s257 + $0x54] sm:$0xf]
      %v303 = vld [vmem:[%s257 + $0x58] sm:$0xf]
      %v304 = vld [vmem:[%s257 + $0x5c] sm:$0xf]
      %v305 = vld [vmem:[%s257 + $0x60] sm:$0xf]
      %v306 = vld [vmem:[%s257 + $0x64] sm:$0xf]
      %v307 = vld [vmem:[%s257 + $0x68] sm:$0xf]
      %v308 = vld [vmem:[%s257 + $0x6c] sm:$0xf]
      %v309 = vld [vmem:[%s257 + $0x70] sm:$0xf]
      %v310 = vld [vmem:[%s257 + $0x74] sm:$0xf]
      %v311 = vld [vmem:[%s257 + $0x78] sm:$0xf]
      %v312 = vld [vmem:[%s257 + $0x7c] sm:$0xf]
      %v313 = vunpack.c.l.bf16 %v281
      %v314 = vunpack.c.l.bf16 %v282
      %v315 = vunpack.c.l.bf16 %v283
      %v316 = vunpack.c.l.bf16 %v284
      %v317 = vunpack.c.l.bf16 %v285
      %v318 = vunpack.c.l.bf16 %v286
      %v319 = vunpack.c.l.bf16 %v287
      %v320 = vunpack.c.l.bf16 %v288
      %v321 = vunpack.c.l.bf16 %v289
      %v322 = vunpack.c.l.bf16 %v290
      %v323 = vunpack.c.l.bf16 %v291
      %v324 = vunpack.c.l.bf16 %v292
      %v325 = vunpack.c.l.bf16 %v293
      %v326 = vunpack.c.l.bf16 %v294
      %v327 = vunpack.c.l.bf16 %v295
      %v328 = vunpack.c.l.bf16 %v296
      %v329 = vunpack.c.l.bf16 %v297
      %v330 = vunpack.c.l.bf16 %v298
      %v331 = vunpack.c.l.bf16 %v299
      %v332 = vunpack.c.l.bf16 %v300
      %v333 = vunpack.c.l.bf16 %v301
      %v334 = vunpack.c.l.bf16 %v302
      %v335 = vunpack.c.l.bf16 %v303
      %v336 = vunpack.c.l.bf16 %v304
      %v337 = vunpack.c.l.bf16 %v305
      %v338 = vunpack.c.l.bf16 %v306
      %v339 = vunpack.c.l.bf16 %v307
      %v340 = vunpack.c.l.bf16 %v308
      %v341 = vunpack.c.l.bf16 %v309
      %v342 = vunpack.c.l.bf16 %v310
      %v343 = vunpack.c.l.bf16 %v311
      %v344 = vunpack.c.l.bf16 %v312
      %v345 = vld [vmem:[%s2] sm:$0x1]
      %v347 = vlaneseq
      %v348 = vshrl.u32 %v347, 7
      %v349 = vsub.s32 0, %v348
      %v350 = vrot.slane %v345, %v349
      %v352 = vmul.f32 %v313, %v350
      %v353 = vmul.f32 %v314, %v350
      %v354 = vmul.f32 %v315, %v350
      %v355 = vmul.f32 %v316, %v350
      %v356 = vmul.f32 %v317, %v350
      %v357 = vmul.f32 %v318, %v350
      %v358 = vmul.f32 %v319, %v350
      %v359 = vmul.f32 %v320, %v350
      %v360 = vmul.f32 %v321, %v350
      %v361 = vmul.f32 %v322, %v350
      %v362 = vmul.f32 %v323, %v350
      %v363 = vmul.f32 %v324, %v350
      %v364 = vmul.f32 %v325, %v350
      %v365 = vmul.f32 %v326, %v350
      %v366 = vmul.f32 %v327, %v350
      %v367 = vmul.f32 %v328, %v350
      %v368 = vmul.f32 %v329, %v350
      %v369 = vmul.f32 %v330, %v350
      %v370 = vmul.f32 %v331, %v350
      %v371 = vmul.f32 %v332, %v350
      %v372 = vmul.f32 %v333, %v350
      %v373 = vmul.f32 %v334, %v350
      %v374 = vmul.f32 %v335, %v350
      %v375 = vmul.f32 %v336, %v350
      %v376 = vmul.f32 %v337, %v350
      %v377 = vmul.f32 %v338, %v350
      %v378 = vmul.f32 %v339, %v350
      %v379 = vmul.f32 %v340, %v350
      %v380 = vmul.f32 %v341, %v350
      %v381 = vmul.f32 %v342, %v350
      %v382 = vmul.f32 %v343, %v350
      %v383 = vmul.f32 %v344, %v350
      %v384 = vld [vmem:[%s3] sm:$0x1]
      %v386 = vlaneseq
      %v387 = vshrl.u32 %v386, 7
      %v388 = vsub.s32 0, %v387
      %v389 = vrot.slane %v384, %v388
      %v391 = vadd.f32 %v352, %v389
      %v392 = vadd.f32 %v353, %v389
      %v393 = vadd.f32 %v354, %v389
      %v394 = vadd.f32 %v355, %v389
      %v395 = vadd.f32 %v356, %v389
      %v396 = vadd.f32 %v357, %v389
      %v397 = vadd.f32 %v358, %v389
      %v398 = vadd.f32 %v359, %v389
      %v399 = vadd.f32 %v360, %v389
      %v400 = vadd.f32 %v361, %v389
      %v401 = vadd.f32 %v362, %v389
      %v402 = vadd.f32 %v363, %v389
      %v403 = vadd.f32 %v364, %v389
      %v404 = vadd.f32 %v365, %v389
      %v405 = vadd.f32 %v366, %v389
      %v406 = vadd.f32 %v367, %v389
      %v407 = vadd.f32 %v368, %v389
      %v408 = vadd.f32 %v369, %v389
      %v409 = vadd.f32 %v370, %v389
      %v410 = vadd.f32 %v371, %v389
      %v411 = vadd.f32 %v372, %v389
      %v412 = vadd.f32 %v373, %v389
      %v413 = vadd.f32 %v374, %v389
      %v414 = vadd.f32 %v375, %v389
      %v415 = vadd.f32 %v376, %v389
      %v416 = vadd.f32 %v377, %v389
      %v417 = vadd.f32 %v378, %v389
      %v418 = vadd.f32 %v379, %v389
      %v419 = vadd.f32 %v380, %v389
      %v420 = vadd.f32 %v381, %v389
      %v421 = vadd.f32 %v382, %v389
      %v422 = vadd.f32 %v383, %v389
      %v423 = vmax.f32 %v391, 0.0
      %v424 = vmax.f32 %v392, 0.0
      %v425 = vmax.f32 %v393, 0.0
      %v426 = vmax.f32 %v394, 0.0
      %v427 = vmax.f32 %v395, 0.0
      %v428 = vmax.f32 %v396, 0.0
      %v429 = vmax.f32 %v397, 0.0
      %v430 = vmax.f32 %v398, 0.0
      %v431 = vmax.f32 %v399, 0.0
      %v432 = vmax.f32 %v400, 0.0
      %v433 = vmax.f32 %v401, 0.0
      %v434 = vmax.f32 %v402, 0.0
      %v435 = vmax.f32 %v403, 0.0
      %v436 = vmax.f32 %v404, 0.0
      %v437 = vmax.f32 %v405, 0.0
      %v438 = vmax.f32 %v406, 0.0
      %v439 = vmax.f32 %v407, 0.0
      %v440 = vmax.f32 %v408, 0.0
      %v441 = vmax.f32 %v409, 0.0
      %v442 = vmax.f32 %v410, 0.0
      %v443 = vmax.f32 %v411, 0.0
      %v444 = vmax.f32 %v412, 0.0
      %v445 = vmax.f32 %v413, 0.0
      %v446 = vmax.f32 %v414, 0.0
      %v447 = vmax.f32 %v415, 0.0
      %v448 = vmax.f32 %v416, 0.0
      %v449 = vmax.f32 %v417, 0.0
      %v450 = vmax.f32 %v418, 0.0
      %v451 = vmax.f32 %v419, 0.0
      %v452 = vmax.f32 %v420, 0.0
      %v453 = vmax.f32 %v421, 0.0
      %v454 = vmax.f32 %v422, 0.0
      %vm455 = vcmask 64512
      %456 = vst.msk [vmem:[%s279] sm:$0xff] %vm455, %v423
      %457 = vst.msk [vmem:[%s279 + $0x8] sm:$0xff] %vm455, %v424
      %458 = vst.msk [vmem:[%s279 + $0x10] sm:$0xff] %vm455, %v425
      %459 = vst.msk [vmem:[%s279 + $0x18] sm:$0xff] %vm455, %v426
      %460 = vst.msk [vmem:[%s279 + $0x20] sm:$0xff] %vm455, %v427
      %461 = vst.msk [vmem:[%s279 + $0x28] sm:$0xff] %vm455, %v428
      %462 = vst.msk [vmem:[%s279 + $0x30] sm:$0xff] %vm455, %v429
      %463 = vst.msk [vmem:[%s279 + $0x38] sm:$0xff] %vm455, %v430
      %464 = vst.msk [vmem:[%s279 + $0x40] sm:$0xff] %vm455, %v431
      %465 = vst.msk [vmem:[%s279 + $0x48] sm:$0xff] %vm455, %v432
      %466 = vst.msk [vmem:[%s279 + $0x50] sm:$0xff] %vm455, %v433
      %467 = vst.msk [vmem:[%s279 + $0x58] sm:$0xff] %vm455, %v434
      %468 = vst.msk [vmem:[%s279 + $0x60] sm:$0xff] %vm455, %v435
      %469 = vst.msk [vmem:[%s279 + $0x68] sm:$0xff] %vm455, %v436
      %470 = vst.msk [vmem:[%s279 + $0x70] sm:$0xff] %vm455, %v437
      %471 = vst.msk [vmem:[%s279 + $0x78] sm:$0xff] %vm455, %v438
      %472 = vst.msk [vmem:[%s279 + $0x80] sm:$0xff] %vm455, %v439
      %473 = vst.msk [vmem:[%s279 + $0x88] sm:$0xff] %vm455, %v440
      %474 = vst.msk [vmem:[%s279 + $0x90] sm:$0xff] %vm455, %v441
      %475 = vst.msk [vmem:[%s279 + $0x98] sm:$0xff] %vm455, %v442
      %476 = vst.msk [vmem:[%s279 + $0xa0] sm:$0xff] %vm455, %v443
      %477 = vst.msk [vmem:[%s279 + $0xa8] sm:$0xff] %vm455, %v444
      %478 = vst.msk [vmem:[%s279 + $0xb0] sm:$0xff] %vm455, %v445
      %479 = vst.msk [vmem:[%s279 + $0xb8] sm:$0xff] %vm455, %v446
      %480 = vst.msk [vmem:[%s279 + $0xc0] sm:$0xff] %vm455, %v447
      %481 = vst.msk [vmem:[%s279 + $0xc8] sm:$0xff] %vm455, %v448
      %482 = vst.msk [vmem:[%s279 + $0xd0] sm:$0xff] %vm455, %v449
      %483 = vst.msk [vmem:[%s279 + $0xd8] sm:$0xff] %vm455, %v450
      %484 = vst.msk [vmem:[%s279 + $0xe0] sm:$0xff] %vm455, %v451
      %485 = vst.msk [vmem:[%s279 + $0xe8] sm:$0xff] %vm455, %v452
      %486 = vst.msk [vmem:[%s279 + $0xf0] sm:$0xff] %vm455, %v453
      %487 = vst.msk [vmem:[%s279 + $0xf8] sm:$0xff] %vm455, %v454
      %v488 = vld [vmem:[%s268] sm:$0xff]
      %v489 = vld [vmem:[%s268 + $0x8] sm:$0xff]
      %v490 = vld [vmem:[%s268 + $0x10] sm:$0xff]
      %v491 = vld [vmem:[%s268 + $0x18] sm:$0xff]
      %v492 = vld [vmem:[%s268 + $0x20] sm:$0xff]
      %v493 = vld [vmem:[%s268 + $0x28] sm:$0xff]
      %v494 = vld [vmem:[%s268 + $0x30] sm:$0xff]
      %v495 = vld [vmem:[%s268 + $0x38] sm:$0xff]
      %v496 = vld [vmem:[%s268 + $0x40] sm:$0xff]
      %v497 = vld [vmem:[%s268 + $0x48] sm:$0xff]
      %v498 = vld [vmem:[%s268 + $0x50] sm:$0xff]
      %v499 = vld [vmem:[%s268 + $0x58] sm:$0xff]
      %v500 = vld [vmem:[%s268 + $0x60] sm:$0xff]
      %v501 = vld [vmem:[%s268 + $0x68] sm:$0xff]
      %v502 = vld [vmem:[%s268 + $0x70] sm:$0xff]
      %v503 = vld [vmem:[%s268 + $0x78] sm:$0xff]
      %v504 = vld [vmem:[%s268 + $0x80] sm:$0xff]
      %v505 = vld [vmem:[%s268 + $0x88] sm:$0xff]
      %v506 = vld [vmem:[%s268 + $0x90] sm:$0xff]
      %v507 = vld [vmem:[%s268 + $0x98] sm:$0xff]
      %v508 = vld [vmem:[%s268 + $0xa0] sm:$0xff]
      %v509 = vld [vmem:[%s268 + $0xa8] sm:$0xff]
      %v510 = vld [vmem:[%s268 + $0xb0] sm:$0xff]
      %v511 = vld [vmem:[%s268 + $0xb8] sm:$0xff]
      %v512 = vld [vmem:[%s268 + $0xc0] sm:$0xff]
      %v513 = vld [vmem:[%s268 + $0xc8] sm:$0xff]
      %v514 = vld [vmem:[%s268 + $0xd0] sm:$0xff]
      %v515 = vld [vmem:[%s268 + $0xd8] sm:$0xff]
      %v516 = vld [vmem:[%s268 + $0xe0] sm:$0xff]
      %v517 = vld [vmem:[%s268 + $0xe8] sm:$0xff]
      %v518 = vld [vmem:[%s268 + $0xf0] sm:$0xff]
      %v519 = vld [vmem:[%s268 + $0xf8] sm:$0xff]
      %552 = vrot.lane.b32.xlu0 %v488, 8
      %v553 = vpop.permute.xlu0 %552
      %554 = vrot.lane.b32.xlu0 %v489, 8
      %v555 = vpop.permute.xlu0 %554
      %556 = vrot.lane.b32.xlu0 %v490, 8
      %v557 = vpop.permute.xlu0 %556
      %558 = vrot.lane.b32.xlu0 %v491, 8
      %v559 = vpop.permute.xlu0 %558
      %560 = vrot.lane.b32.xlu0 %v492, 8
      %v561 = vpop.permute.xlu0 %560
      %562 = vrot.lane.b32.xlu0 %v493, 8
      %v563 = vpop.permute.xlu0 %562
      %564 = vrot.lane.b32.xlu0 %v494, 8
      %v565 = vpop.permute.xlu0 %564
      %566 = vrot.lane.b32.xlu0 %v495, 8
      %v567 = vpop.permute.xlu0 %566
      %568 = vrot.lane.b32.xlu0 %v496, 8
      %v569 = vpop.permute.xlu0 %568
      %570 = vrot.lane.b32.xlu0 %v497, 8
      %v571 = vpop.permute.xlu0 %570
      %572 = vrot.lane.b32.xlu0 %v498, 8
      %v573 = vpop.permute.xlu0 %572
      %574 = vrot.lane.b32.xlu0 %v499, 8
      %v575 = vpop.permute.xlu0 %574
      %576 = vrot.lane.b32.xlu0 %v500, 8
      %v577 = vpop.permute.xlu0 %576
      %578 = vrot.lane.b32.xlu0 %v501, 8
      %v579 = vpop.permute.xlu0 %578
      %580 = vrot.lane.b32.xlu0 %v502, 8
      %v581 = vpop.permute.xlu0 %580
      %582 = vrot.lane.b32.xlu0 %v503, 8
      %v583 = vpop.permute.xlu0 %582
      %584 = vrot.lane.b32.xlu0 %v504, 8
      %v585 = vpop.permute.xlu0 %584
      %586 = vrot.lane.b32.xlu0 %v505, 8
      %v587 = vpop.permute.xlu0 %586
      %588 = vrot.lane.b32.xlu0 %v506, 8
      %v589 = vpop.permute.xlu0 %588
      %590 = vrot.lane.b32.xlu0 %v507, 8
      %v591 = vpop.permute.xlu0 %590
      %592 = vrot.lane.b32.xlu0 %v508, 8
      %v593 = vpop.permute.xlu0 %592
      %594 = vrot.lane.b32.xlu0 %v509, 8
      %v595 = vpop.permute.xlu0 %594
      %596 = vrot.lane.b32.xlu0 %v510, 8
      %v597 = vpop.permute.xlu0 %596
      %598 = vrot.lane.b32.xlu0 %v511, 8
      %v599 = vpop.permute.xlu0 %598
      %600 = vrot.lane.b32.xlu0 %v512, 8
      %v601 = vpop.permute.xlu0 %600
      %602 = vrot.lane.b32.xlu0 %v513, 8
      %v603 = vpop.permute.xlu0 %602
      %604 = vrot.lane.b32.xlu0 %v514, 8
      %v605 = vpop.permute.xlu0 %604
      %606 = vrot.lane.b32.xlu0 %v515, 8
      %v607 = vpop.permute.xlu0 %606
      %608 = vrot.lane.b32.xlu0 %v516, 8
      %v609 = vpop.permute.xlu0 %608
      %610 = vrot.lane.b32.xlu0 %v517, 8
      %v611 = vpop.permute.xlu0 %610
      %612 = vrot.lane.b32.xlu0 %v518, 8
      %v613 = vpop.permute.xlu0 %612
      %614 = vrot.lane.b32.xlu0 %v519, 8
      %v615 = vpop.permute.xlu0 %614
      %vm648 = vcmask 130112
      %649 = vst.msk [vmem:[%s279] sm:$0xff] %vm648, %v553
      %650 = vst.msk [vmem:[%s279 + $0x8] sm:$0xff] %vm648, %v555
      %651 = vst.msk [vmem:[%s279 + $0x10] sm:$0xff] %vm648, %v557
      %652 = vst.msk [vmem:[%s279 + $0x18] sm:$0xff] %vm648, %v559
      %653 = vst.msk [vmem:[%s279 + $0x20] sm:$0xff] %vm648, %v561
      %654 = vst.msk [vmem:[%s279 + $0x28] sm:$0xff] %vm648, %v563
      %655 = vst.msk [vmem:[%s279 + $0x30] sm:$0xff] %vm648, %v565
      %656 = vst.msk [vmem:[%s279 + $0x38] sm:$0xff] %vm648, %v567
      %657 = vst.msk [vmem:[%s279 + $0x40] sm:$0xff] %vm648, %v569
      %658 = vst.msk [vmem:[%s279 + $0x48] sm:$0xff] %vm648, %v571
      %659 = vst.msk [vmem:[%s279 + $0x50] sm:$0xff] %vm648, %v573
      %660 = vst.msk [vmem:[%s279 + $0x58] sm:$0xff] %vm648, %v575
      %661 = vst.msk [vmem:[%s279 + $0x60] sm:$0xff] %vm648, %v577
      %662 = vst.msk [vmem:[%s279 + $0x68] sm:$0xff] %vm648, %v579
      %663 = vst.msk [vmem:[%s279 + $0x70] sm:$0xff] %vm648, %v581
      %664 = vst.msk [vmem:[%s279 + $0x78] sm:$0xff] %vm648, %v583
      %665 = vst.msk [vmem:[%s279 + $0x80] sm:$0xff] %vm648, %v585
      %666 = vst.msk [vmem:[%s279 + $0x88] sm:$0xff] %vm648, %v587
      %667 = vst.msk [vmem:[%s279 + $0x90] sm:$0xff] %vm648, %v589
      %668 = vst.msk [vmem:[%s279 + $0x98] sm:$0xff] %vm648, %v591
      %669 = vst.msk [vmem:[%s279 + $0xa0] sm:$0xff] %vm648, %v593
      %670 = vst.msk [vmem:[%s279 + $0xa8] sm:$0xff] %vm648, %v595
      %671 = vst.msk [vmem:[%s279 + $0xb0] sm:$0xff] %vm648, %v597
      %672 = vst.msk [vmem:[%s279 + $0xb8] sm:$0xff] %vm648, %v599
      %673 = vst.msk [vmem:[%s279 + $0xc0] sm:$0xff] %vm648, %v601
      %674 = vst.msk [vmem:[%s279 + $0xc8] sm:$0xff] %vm648, %v603
      %675 = vst.msk [vmem:[%s279 + $0xd0] sm:$0xff] %vm648, %v605
      %676 = vst.msk [vmem:[%s279 + $0xd8] sm:$0xff] %vm648, %v607
      %677 = vst.msk [vmem:[%s279 + $0xe0] sm:$0xff] %vm648, %v609
      %678 = vst.msk [vmem:[%s279 + $0xe8] sm:$0xff] %vm648, %v611
      %679 = vst.msk [vmem:[%s279 + $0xf0] sm:$0xff] %vm648, %v613
      %680 = vst.msk [vmem:[%s279 + $0xf8] sm:$0xff] %vm648, %v615
      %s681 = smul.u32 16, %s20
      %p682 = scmp.lt.s32.totalorder %s19, 1
      %s683 = scalar_select %p682, %s19, 1
      %p684 = scmp.lt.s32.totalorder %s681, 15
      %s685 = scalar_select %p684, %s681, 15
      %s686 = smul.addr %s685, 2
      %s687 = smul.addr %s683, 32
      %s688 = sadd.s32 %s686, %s687
      %s689 = smul.addr %s688, 8
      %s690 = scalar_lea.vmem %s4, %s689
      // Predicated region
      $region37: #{unet_up_forward.3} parent=35 // pred_check
        %p691 = pneg %p145
      $region38: #{unet_up_forward.3} parent=35 // pred_check_branch
        %693 = sbr.rel (%p691) target = $region40
      $region39: #{unet_up_forward.3} parent=35 // pred_region
        %s694 = smul.u32 16, %s20
      $region40: #{unet_up_forward.3} parent=35 // pred_fallthru
        _
    $region36: #{unet_up_forward.3} parent=5 // pred_fallthru
      _
    %p695 = scmp.le.s32.totalorder 2, %s10
    // Predicated region
    $region41: #{unet_up_forward.3} parent=5 // pred_check
      %p696 = pneg %p695
    $region42: #{unet_up_forward.3} parent=5 // pred_check_branch
      %698 = sbr.rel (%p696) target = $region44
    $region43: #{unet_up_forward.3} parent=5 // pred_region
      %s699 = ssub.s32 %s10, 2
      // Predicated region
      $region45: #{unet_up_forward.3} parent=43 // pred_check
        %p700 = pneg %p151
      $region46: #{unet_up_forward.3} parent=43 // pred_check_branch
        %702 = sbr.rel (%p700) target = $region48
      $region47: #{unet_up_forward.3} parent=43 // pred_region
        %s703 = smul.u32 16, %s22
        %p704 = scmp.lt.s32.totalorder %s21, 1
        %s705 = scalar_select %p704, %s21, 1
        %p706 = scmp.lt.s32.totalorder %s703, 15
        %s707 = scalar_select %p706, %s703, 15
        %s708 = smul.addr %s707, 2
        %s709 = smul.addr %s705, 32
        %s710 = sadd.s32 %s708, %s709
        %s711 = smul.addr %s710, 8
        %s712 = scalar_lea.vmem %s4, %s711
      $region48: #{unet_up_forward.3} parent=43 // pred_fallthru
        _
    $region44: #{unet_up_forward.3} parent=5 // pred_fallthru
      _
  $region6: #{unet_up_forward.3} parent=0 // loop_footer
    %s14 = sadd.s32 1, %s10
  $region7: #{unet_up_forward.3} parent=0 // loop_footer_branch
    %9 = sbr.rel target = $region3
  $region8: #{unet_up_forward.3} parent=0 // loop_exit
    _

// kernel: unet_up_forward.2
$region0: #{unet_up_forward.2}
  #allocation0 [shape = 'u32[]', space=smem, size = 0x4, offset = 0x4, fixed_abs, tag = 'smem constant byte address 0x4 - core index']
  #allocation1 [shape = 'u32[144,128]{1,0:T(1,128)}', space=vmem, size = 0x12000, scoped, tag = 'internal scratch']
  %s0 = inlined_call_operand.vmem [shape: bf16[2,10,10,4], index: 0, kind: input, shape index: {}]
  %s1 = inlined_call_operand.vmem [shape: bf16[2,2,16,8], index: 1, kind: input, shape index: {}]
  %s2 = inlined_call_operand.vmem [shape: bf16[2,4,8,8,8], index: 2, kind: output, shape index: {0}]
  %s3 = inlined_call_operand.vmem [shape: f32[2,2,2,8], index: 3, kind: output, shape index: {1}]
  %4 = xla_tuple %s2, %s3
  %s5 = sld [smem:[#allocation0]]
  $region49: #{unet_up_forward.2} parent=0
    _
  %s7 = ssub.s32 1, %s5
  %s8 = scalar_select 0, %s7, %s5
  loop: start=0, step=1, limit=6
  $region2: #{unet_up_forward.2} parent=0 // loop_pre_header
    _
  $region3: #{unet_up_forward.2} parent=0 // loop_header
    %s10 = sphi 0, %s14
    %p11 = scmp.ge.s32.totalorder %s10, 6
    %s17 = sphi 0, %s29
    %s18 = sphi 0, %s25
    %s19 = sphi 0, %s17
    %s20 = sphi 0, %s18
    %s21 = sphi 0, %s19
    %s22 = sphi 0, %s20
    %s32 = sphi 0, %s34
    %s35 = sphi 0, %s32
    %s36 = sphi 0, %s35
    %s52 = sphi 0, %s36
    %s58 = sphi 0, %s60
    %s61 = sphi 0, %s58
    %s62 = sphi 0, %s61
    %s78 = sphi 0, %s62
    %s86 = sphi 0, %s88
    %s89 = sphi 0, %s86
    %s90 = sphi 0, %s89
    %s106 = sphi 0, %s90
    %s114 = sphi 0, %s116
    %s117 = sphi 0, %s114
    %s118 = sphi 0, %s117
    %s134 = sphi 0, %s118
  $region4: #{unet_up_forward.2} parent=0 // loop_header_branch
    %13 = sbr.rel (%p11) target = $region8
  $region5: #{unet_up_forward.2} parent=0 // loop_body
    %s15 = ssub.s32 %s10, 1
    %s16 = ssub.s32 %s10, 2
    %s23 = sadd.s32 1, %s18
    %p24 = scmp.ge.s32.totalorder %s23, 2
    %s25 = scalar_select %p24, 0, %s23
    %s26 = sadd.s32 1, %s17
    %s27 = scalar_select %p24, %s26, %s17
    %p28 = scmp.ge.s32.totalorder %s27, 2
    %s29 = scalar_select %p28, 0, %s27
    %s30 = ssub.s32 %s17, %s29
    %p31 = scmp.eq.s32.totalorder %s30, 0
    %s33 = sadd.s32 %s32, 1
    %s34 = scalar_select %p31, %s32, %s33
    %p37 = pneg %p31
    %p38 = scmp.eq.s32.totalorder %s10, 3
    %p39 = por %p37, %p38
    %p40 = scmp.ne.s32.totalorder %s32, %s35
    %p41 = scmp.eq.s32.totalorder %s10, 0
    %p42 = por %p40, %p41
    %p43 = scmp.ne.s32.totalorder %s32, %s35
    %p44 = scmp.eq.s32.totalorder %s15, 3
    %p45 = por %p43, %p44
    %p46 = scmp.ne.s32.totalorder %s35, %s36
    %p47 = scmp.eq.s32.totalorder %s15, 0
    %p48 = por %p46, %p47
    %p49 = scmp.ne.s32.totalorder %s35, %s36
    %p50 = scmp.eq.s32.totalorder %s16, 3
    %p51 = por %p49, %p50
    %p53 = scmp.ne.s32.totalorder %s36, %s52
    %p54 = scmp.eq.s32.totalorder %s16, 0
    %p55 = por %p53, %p54
    %s56 = ssub.s32 %s18, %s25
    %p57 = scmp.eq.s32.totalorder %s56, 0
    %s59 = sadd.s32 %s58, 1
    %s60 = scalar_select %p57, %s58, %s59
    %p63 = pneg %p57
    %p64 = scmp.eq.s32.totalorder %s10, 3
    %p65 = por %p63, %p64
    %p66 = scmp.ne.s32.totalorder %s58, %s61
    %p67 = scmp.eq.s32.totalorder %s10, 0
    %p68 = por %p66, %p67
    %p69 = scmp.ne.s32.totalorder %s58, %s61
    %p70 = scmp.eq.s32.totalorder %s15, 3
    %p71 = por %p69, %p70
    %p72 = scmp.ne.s32.totalorder %s61, %s62
    %p73 = scmp.eq.s32.totalorder %s15, 0
    %p74 = por %p72, %p73
    %p75 = scmp.ne.s32.totalorder %s61, %s62
    %p76 = scmp.eq.s32.totalorder %s16, 3
    %p77 = por %p75, %p76
    %p79 = scmp.ne.s32.totalorder %s62, %s78
    %p80 = scmp.eq.s32.totalorder %s16, 0
    %p81 = por %p79, %p80
    %s82 = ssub.s32 %s17, %s29
    %s83 = ssub.s32 %s18, %s25
    %s84 = sor.u32 %s82, %s83
    %p85 = scmp.eq.s32.totalorder %s84, 0
    %s87 = sadd.s32 %s86, 1
    %s88 = scalar_select %p85, %s86, %s87
    %p91 = pneg %p85
    %p92 = scmp.eq.s32.totalorder %s10, 3
    %p93 = por %p91, %p92
    %p94 = scmp.ne.s32.totalorder %s86, %s89
    %p95 = scmp.eq.s32.totalorder %s10, 0
    %p96 = por %p94, %p95
    %p97 = scmp.ne.s32.totalorder %s86, %s89
    %p98 = scmp.eq.s32.totalorder %s15, 3
    %p99 = por %p97, %p98
    %p100 = scmp.ne.s32.totalorder %s89, %s90
    %p101 = scmp.eq.s32.totalorder %s15, 0
    %p102 = por %p100, %p101
    %p103 = scmp.ne.s32.totalorder %s89, %s90
    %p104 = scmp.eq.s32.totalorder %s16, 3
    %p105 = por %p103, %p104
    %p107 = scmp.ne.s32.totalorder %s90, %s106
    %p108 = scmp.eq.s32.totalorder %s16, 0
    %p109 = por %p107, %p108
    %s110 = ssub.s32 %s17, %s29
    %s111 = ssub.s32 %s18, %s25
    %s112 = sor.u32 %s110, %s111
    %p113 = scmp.eq.s32.totalorder %s112, 0
    %s115 = sadd.s32 %s114, 1
    %s116 = scalar_select %p113, %s114, %s115
    %p119 = pneg %p113
    %p120 = scmp.eq.s32.totalorder %s10, 3
    %p121 = por %p119, %p120
    %p122 = scmp.ne.s32.totalorder %s114, %s117
    %p123 = scmp.eq.s32.totalorder %s10, 0
    %p124 = por %p122, %p123
    %p125 = scmp.ne.s32.totalorder %s114, %s117
    %p126 = scmp.eq.s32.totalorder %s15, 3
    %p127 = por %p125, %p126
    %p128 = scmp.ne.s32.totalorder %s117, %s118
    %p129 = scmp.eq.s32.totalorder %s15, 0
    %p130 = por %p128, %p129
    %p131 = scmp.ne.s32.totalorder %s117, %s118
    %p132 = scmp.eq.s32.totalorder %s16, 3
    %p133 = por %p131, %p132
    %p135 = scmp.ne.s32.totalorder %s118, %s134
    %p136 = scmp.eq.s32.totalorder %s16, 0
    %p137 = por %p135, %p136
    %p138 = scmp.le.s32.totalorder 1, %s10
    %p139 = scmp.lt.s32.totalorder %s10, 5
    %p140 = pnand %p138, %p139
    %p141 = pneg %p140
    // Predicated region
    $region9: #{unet_up_forward.2} parent=5 // pred_check
      _
    $region10: #{unet_up_forward.2} parent=5 // pred_check_branch
      %143 = sbr.rel (%p140) target = $region12
    $region11: #{unet_up_forward.2} parent=5 // pred_region
      %s144 = ssub.s32 %s10, 1
    $region12: #{unet_up_forward.2} parent=5 // pred_fallthru
      _
    %p145 = scmp.lt.s32.totalorder %s10, 4
    // Predicated region
    $region13: #{unet_up_forward.2} parent=5 // pred_check
      %p146 = pneg %p145
    $region14: #{unet_up_forward.2} parent=5 // pred_check_branch
      %148 = sbr.rel (%p146) target = $region16
    $region15: #{unet_up_forward.2} parent=5 // pred_region
      // Predicated region
      $region17: #{unet_up_forward.2} parent=15 // pred_check
        %p149 = pneg %p42
      $region18: #{unet_up_forward.2} parent=15 // pred_check_branch
        %151 = sbr.rel (%p149) target = $region20
      $region19: #{unet_up_forward.2} parent=15 // pred_region
        %p152 = scmp.lt.s32.totalorder %s17, 1
        %s153 = scalar_select %p152, %s17, 1
        %s154 = smul.addr %s153, 20
        %s155 = smul.addr %s154, 4
        %s156 = scalar_lea.vmem %s0, %s155
      $region20: #{unet_up_forward.2} parent=15 // pred_fallthru
        _
      // Predicated region
      $region21: #{unet_up_forward.2} parent=15 // pred_check
        %p157 = pneg %p68
      $region22: #{unet_up_forward.2} parent=15 // pred_check_branch
        %159 = sbr.rel (%p157) target = $region24
      $region23: #{unet_up_forward.2} parent=15 // pred_region
        %p160 = scmp.lt.s32.totalorder %s18, 1
        %s161 = scalar_select %p160, %s18, 1
        %s162 = smul.addr %s161, 4
        %s163 = smul.addr %s162, 4
        %s164 = scalar_lea.vmem %s1, %s163
      $region24: #{unet_up_forward.2} parent=15 // pred_fallthru
        _
    $region16: #{unet_up_forward.2} parent=5 // pred_fallthru
      _
    %p165 = scmp.le.s32.totalorder 1, %s10
    %p166 = scmp.lt.s32.totalorder %s10, 5
    %p167 = pnand %p165, %p166
    %p168 = pneg %p167
    // Predicated region
    $region25: #{unet_up_forward.2} parent=5 // pred_check
      _
    $region26: #{unet_up_forward.2} parent=5 // pred_check_branch
      %170 = sbr.rel (%p167) target = $region28
    $region27: #{unet_up_forward.2} parent=5 // pred_region
      %s171 = ssub.s32 %s10, 1
      %p172 = scmp.lt.s32.totalorder %s19, 1
      %s173 = scalar_select %p172, %s19, 1
      %s174 = smul.addr %s173, 20
      %s175 = smul.addr %s174, 4
      %s176 = scalar_lea.vmem %s0, %s175
      %p177 = pneg %p48
      %p178 = pneg %p45
      %p179 = scmp.lt.s32.totalorder %s20, 1
      %s180 = scalar_select %p179, %s20, 1
      %s181 = smul.addr %s180, 4
      %s182 = smul.addr %s181, 4
      %s183 = scalar_lea.vmem %s1, %s182
      %p184 = pneg %p74
      %p185 = pneg %p71
      %p186 = pneg %p102
      %p187 = pneg %p99
      %s188 = smul.u32 2, %s20
      %p189 = scmp.lt.s32.totalorder %s19, 1
      %s190 = scalar_select %p189, %s19, 1
      %p191 = scmp.lt.s32.totalorder %s188, 3
      %s192 = scalar_select %p191, %s188, 3
      %s193 = smul.addr %s192, 8
      %s194 = smul.addr %s190, 32
      %s195 = sadd.s32 %s193, %s194
      %s196 = smul.addr %s195, 4
      %s197 = scalar_lea.vmem %s2, %s196
      %p198 = pneg %p130
      %p199 = pneg %p127
      %p200 = scmp.lt.s32.totalorder %s19, 1
      %s201 = scalar_select %p200, %s19, 1
      %p202 = scmp.lt.s32.totalorder %s20, 1
      %s203 = scalar_select %p202, %s20, 1
      %s204 = smul.addr %s201, 2
      %s205 = sadd.s32 %s203, %s204
      %s206 = smul.addr %s205, 2
      %s207 = scalar_lea.vmem %s3, %s206
      %p208 = scmp.lt.s32.totalorder %s19, 1
      %s209 = scalar_select %p208, %s19, 1
      %s210 = smul.addr %s209, 20
      %s211 = smul.addr %s210, 4
      %s212 = scalar_lea.vmem %s0, %s211
      %p213 = scmp.lt.s32.totalorder %s20, 1
      %s214 = scalar_select %p213, %s20, 1
      %s215 = smul.addr %s214, 4
      %s216 = smul.addr %s215, 4
      %s217 = scalar_lea.vmem %s1, %s216
      %s218 = smul.u32 2, %s20
      %p219 = scmp.lt.s32.totalorder %s19, 1
      %s220 = scalar_select %p219, %s19, 1
      %p221 = scmp.lt.s32.totalorder %s218, 3
      %s222 = scalar_select %p221, %s218, 3
      %s223 = smul.addr %s222, 8
      %s224 = smul.addr %s220, 32
      %s225 = sadd.s32 %s223, %s224
      %s226 = smul.addr %s225, 4
      %s227 = scalar_lea.vmem %s2, %s226
      %s228 = smul.u32 2, %s20
      %p229 = scmp.lt.s32.totalorder %s19, 1
      %s230 = scalar_select %p229, %s19, 1
      %p231 = scmp.lt.s32.totalorder %s20, 1
      %s232 = scalar_select %p231, %s20, 1
      %s233 = smul.addr %s230, 2
      %s234 = sadd.s32 %s232, %s233
      %s235 = smul.addr %s234, 2
      %s236 = scalar_lea.vmem %s3, %s235
      %s238 = smul.u32 %s20, 2
      %s239 = smul.addr %s238, 4
      %s240 = scalar_lea.vmem %s212, %s239
      %v241 = vld [vmem:[%s240] sm:$0xf]
      %v242 = vld [vmem:[%s240 + $0x8] sm:$0xf]
      %v243 = vld [vmem:[%s240 + $0x10] sm:$0xf]
      %v244 = vld [vmem:[%s240 + $0x18] sm:$0xf]
      %v245 = vld [vmem:[%s240 + $0x20] sm:$0xf]
      %v246 = vld [vmem:[%s240 + $0x28] sm:$0xf]
      %v247 = vld [vmem:[%s240 + $0x30] sm:$0xf]
      %v248 = vld [vmem:[%s240 + $0x38] sm:$0xf]
      %v249 = vld [vmem:[%s240 + $0x4] sm:$0x1]
      %v250 = vld [vmem:[%s240 + $0xc] sm:$0x1]
      %v251 = vld [vmem:[%s240 + $0x14] sm:$0x1]
      %v252 = vld [vmem:[%s240 + $0x1c] sm:$0x1]
      %v253 = vld [vmem:[%s240 + $0x24] sm:$0x1]
      %v254 = vld [vmem:[%s240 + $0x2c] sm:$0x1]
      %v255 = vld [vmem:[%s240 + $0x34] sm:$0x1]
      %v256 = vld [vmem:[%s240 + $0x3c] sm:$0x1]
      %s257 = sadd.s32 %s20, 1
      %s258 = smul.u32 %s257, 2
      %s259 = smul.addr %s258, 4
      %s260 = scalar_lea.vmem %s212, %s259
      %v261 = vld [vmem:[%s260] sm:$0xf]
      %v262 = vld [vmem:[%s260 + $0x8] sm:$0xf]
      %v263 = vld [vmem:[%s260 + $0x10] sm:$0xf]
      %v264 = vld [vmem:[%s260 + $0x18] sm:$0xf]
      %v265 = vld [vmem:[%s260 + $0x20] sm:$0xf]
      %v266 = vld [vmem:[%s260 + $0x28] sm:$0xf]
      %v267 = vld [vmem:[%s260 + $0x30] sm:$0xf]
      %v268 = vld [vmem:[%s260 + $0x38] sm:$0xf]
      %v269 = vld [vmem:[%s260 + $0x4] sm:$0x1]
      %v270 = vld [vmem:[%s260 + $0xc] sm:$0x1]
      %v271 = vld [vmem:[%s260 + $0x14] sm:$0x1]
      %v272 = vld [vmem:[%s260 + $0x1c] sm:$0x1]
      %v273 = vld [vmem:[%s260 + $0x24] sm:$0x1]
      %v274 = vld [vmem:[%s260 + $0x2c] sm:$0x1]
      %v275 = vld [vmem:[%s260 + $0x34] sm:$0x1]
      %v276 = vld [vmem:[%s260 + $0x3c] sm:$0x1]
      %v293 = vunpack.c.l.b16 %v241
      %v294 = vunpack.c.l.b16 %v249
      %v295 = vunpack.c.l.b16 %v242
      %v296 = vunpack.c.l.b16 %v250
      %v297 = vunpack.c.l.b16 %v243
      %v298 = vunpack.c.l.b16 %v251
      %v299 = vunpack.c.l.b16 %v244
      %v300 = vunpack.c.l.b16 %v252
      %v301 = vunpack.c.l.b16 %v245
      %v302 = vunpack.c.l.b16 %v253
      %v303 = vunpack.c.l.b16 %v246
      %v304 = vunpack.c.l.b16 %v254
      %v305 = vunpack.c.l.b16 %v247
      %v306 = vunpack.c.l.b16 %v255
      %v307 = vunpack.c.l.b16 %v248
      %v308 = vunpack.c.l.b16 %v256
      %v309 = vpack.c.b16 %v294, %v293
      %v310 = vpack.c.b16 %v296, %v295
      %v311 = vpack.c.b16 %v298, %v297
      %v312 = vpack.c.b16 %v300, %v299
      %v313 = vpack.c.b16 %v302, %v301
      %v314 = vpack.c.b16 %v304, %v303
      %v315 = vpack.c.b16 %v306, %v305
      %v316 = vpack.c.b16 %v308, %v307
      %v318 = vshrl.u32 %v309, 16
      %v320 = vshll.u32 %v309, 16
      %v322 = vrot.slane %v320, 1
      %v323 = vor.u32 %v318, %v322
      %v325 = vshrl.u32 %v310, 16
      %v327 = vshll.u32 %v310, 16
      %v329 = vrot.slane %v327, 1
      %v330 = vor.u32 %v325, %v329
      %v332 = vshrl.u32 %v311, 16
      %v334 = vshll.u32 %v311, 16
      %v336 = vrot.slane %v334, 1
      %v337 = vor.u32 %v332, %v336
      %v339 = vshrl.u32 %v312, 16
      %v341 = vshll.u32 %v312, 16
      %v343 = vrot.slane %v341, 1
      %v344 = vor.u32 %v339, %v343
      %v346 = vshrl.u32 %v313, 16
      %v348 = vshll.u32 %v313, 16
      %v350 = vrot.slane %v348, 1
      %v351 = vor.u32 %v346, %v350
      %v353 = vshrl.u32 %v314, 16
      %v355 = vshll.u32 %v314, 16
      %v357 = vrot.slane %v355, 1
      %v358 = vor.u32 %v353, %v357
      %v360 = vshrl.u32 %v315, 16
      %v362 = vshll.u32 %v315, 16
      %v364 = vrot.slane %v362, 1
      %v365 = vor.u32 %v360, %v364
      %v367 = vshrl.u32 %v316, 16
      %v369 = vshll.u32 %v316, 16
      %v371 = vrot.slane %v369, 1
      %v372 = vor.u32 %v367, %v371
      %373 = vrot.lane.b32.xlu0 %v323, 4
      %v374 = vpop.permute.xlu0 %373
      %375 = vrot.lane.b32.xlu0 %v330, 4
      %v376 = vpop.permute.xlu0 %375
      %377 = vrot.lane.b32.xlu0 %v337, 4
      %v378 = vpop.permute.xlu0 %377
      %379 = vrot.lane.b32.xlu0 %v344, 4
      %v380 = vpop.permute.xlu0 %379
      %381 = vrot.lane.b32.xlu0 %v351, 4
      %v382 = vpop.permute.xlu0 %381
      %383 = vrot.lane.b32.xlu0 %v358, 4
      %v384 = vpop.permute.xlu0 %383
      %385 = vrot.lane.b32.xlu0 %v365, 4
      %v386 = vpop.permute.xlu0 %385
      %387 = vrot.lane.b32.xlu0 %v372, 4
      %v388 = vpop.permute.xlu0 %387
      %v397 = vunpack.c.l.b16 %v261
      %v398 = vunpack.c.l.b16 %v262
      %v399 = vunpack.c.l.b16 %v263
      %v400 = vunpack.c.l.b16 %v264
      %v401 = vunpack.c.l.b16 %v265
      %v402 = vunpack.c.l.b16 %v266
      %v403 = vunpack.c.l.b16 %v267
      %v404 = vunpack.c.l.b16 %v268
      %v405 = vpack.c.b16 %v397, %v397
      %v406 = vpack.c.b16 %v398, %v398
      %v407 = vpack.c.b16 %v399, %v399
      %v408 = vpack.c.b16 %v400, %v400
      %v409 = vpack.c.b16 %v401, %v401
      %v410 = vpack.c.b16 %v402, %v402
      %v411 = vpack.c.b16 %v403, %v403
      %v412 = vpack.c.b16 %v404, %v404
      %413 = vrot.lane.b32.xlu0 %v405, 8
      %v414 = vpop.permute.xlu0 %413
      %415 = vrot.lane.b32.xlu0 %v406, 8
      %v416 = vpop.permute.xlu0 %415
      %417 = vrot.lane.b32.xlu0 %v407, 8
      %v418 = vpop.permute.xlu0 %417
      %419 = vrot.lane.b32.xlu0 %v408, 8
      %v420 = vpop.permute.xlu0 %419
      %421 = vrot.lane.b32.xlu0 %v409, 8
      %v422 = vpop.permute.xlu0 %421
      %423 = vrot.lane.b32.xlu0 %v410, 8
      %v424 = vpop.permute.xlu0 %423
      %425 = vrot.lane.b32.xlu0 %v411, 8
      %v426 = vpop.permute.xlu0 %425
      %427 = vrot.lane.b32.xlu0 %v412, 8
      %v428 = vpop.permute.xlu0 %427
      %v437 = vunpack.c.l.b16 %v269
      %v438 = vunpack.c.l.b16 %v270
      %v439 = vunpack.c.l.b16 %v271
      %v440 = vunpack.c.l.b16 %v272
      %v441 = vunpack.c.l.b16 %v273
      %v442 = vunpack.c.l.b16 %v274
      %v443 = vunpack.c.l.b16 %v275
      %v444 = vunpack.c.l.b16 %v276
      %v445 = vpack.c.b16 %v437, %v397
      %v446 = vpack.c.b16 %v438, %v398
      %v447 = vpack.c.b16 %v439, %v399
      %v448 = vpack.c.b16 %v440, %v400
      %v449 = vpack.c.b16 %v441, %v401
      %v450 = vpack.c.b16 %v442, %v402
      %v451 = vpack.c.b16 %v443, %v403
      %v452 = vpack.c.b16 %v444, %v404
      %v454 = vshrl.u32 %v445, 16
      %v456 = vshll.u32 %v445, 16
      %v458 = vrot.slane %v456, 1
      %v459 = vor.u32 %v454, %v458
      %v461 = vshrl.u32 %v446, 16
      %v463 = vshll.u32 %v446, 16
      %v465 = vrot.slane %v463, 1
      %v466 = vor.u32 %v461, %v465
      %v468 = vshrl.u32 %v447, 16
      %v470 = vshll.u32 %v447, 16
      %v472 = vrot.slane %v470, 1
      %v473 = vor.u32 %v468, %v472
      %v475 = vshrl.u32 %v448, 16
      %v477 = vshll.u32 %v448, 16
      %v479 = vrot.slane %v477, 1
      %v480 = vor.u32 %v475, %v479
      %v482 = vshrl.u32 %v449, 16
      %v484 = vshll.u32 %v449, 16
      %v486 = vrot.slane %v484, 1
      %v487 = vor.u32 %v482, %v486
      %v489 = vshrl.u32 %v450, 16
      %v491 = vshll.u32 %v450, 16
      %v493 = vrot.slane %v491, 1
      %v494 = vor.u32 %v489, %v493
      %v496 = vshrl.u32 %v451, 16
      %v498 = vshll.u32 %v451, 16
      %v500 = vrot.slane %v498, 1
      %v501 = vor.u32 %v496, %v500
      %v503 = vshrl.u32 %v452, 16
      %v505 = vshll.u32 %v452, 16
      %v507 = vrot.slane %v505, 1
      %v508 = vor.u32 %v503, %v507
      %509 = vrot.lane.b32.xlu0 %v459, 12
      %v510 = vpop.permute.xlu0 %509
      %511 = vrot.lane.b32.xlu0 %v466, 12
      %v512 = vpop.permute.xlu0 %511
      %513 = vrot.lane.b32.xlu0 %v473, 12
      %v514 = vpop.permute.xlu0 %513
      %515 = vrot.lane.b32.xlu0 %v480, 12
      %v516 = vpop.permute.xlu0 %515
      %517 = vrot.lane.b32.xlu0 %v487, 12
      %v518 = vpop.permute.xlu0 %517
      %519 = vrot.lane.b32.xlu0 %v494, 12
      %v520 = vpop.permute.xlu0 %519
      %521 = vrot.lane.b32.xlu0 %v501, 12
      %v522 = vpop.permute.xlu0 %521
      %523 = vrot.lane.b32.xlu0 %v508, 12
      %v524 = vpop.permute.xlu0 %523
      %vm525 = vcmask 31744
      %v528 = vsel %vm525, %v241, %v374
      %v531 = vsel %vm525, %v242, %v376
      %v534 = vsel %vm525, %v243, %v378
      %v537 = vsel %vm525, %v244, %v380
      %v540 = vsel %vm525, %v245, %v382
      %v543 = vsel %vm525, %v246, %v384
      %v546 = vsel %vm525, %v247, %v386
      %v549 = vsel %vm525, %v248, %v388
      %vm550 = vcmask 64512
      %v552 = vsel %vm550, %v528, %v414
      %v554 = vsel %vm550, %v531, %v416
      %v556 = vsel %vm550, %v534, %v418
      %v558 = vsel %vm550, %v537, %v420
      %v560 = vsel %vm550, %v540, %v422
      %v562 = vsel %vm550, %v543, %v424
      %v564 = vsel %vm550, %v546, %v426
      %v566 = vsel %vm550, %v549, %v428
      %vm567 = vcmask 97280
      %v569 = vsel %vm567, %v552, %v510
      %v571 = vsel %vm567, %v554, %v512
      %v573 = vsel %vm567, %v556, %v514
      %v575 = vsel %vm567, %v558, %v516
      %v577 = vsel %vm567, %v560, %v518
      %v579 = vsel %vm567, %v562, %v520
      %v581 = vsel %vm567, %v564, %v522
      %v583 = vsel %vm567, %v566, %v524
      %v584 = vld [vmem:[%s217] sm:$0xf]
      %v585 = vld [vmem:[%s217 + $0x4] sm:$0xf]
      %v594 = vunpack.c.l.b16 %v569
      %v595 = vunpack.c.l.b16 %v571
      %v596 = vunpack.c.l.b16 %v573
      %v597 = vunpack.c.l.b16 %v575
      %v598 = vunpack.c.l.b16 %v577
      %v599 = vunpack.c.l.b16 %v579
      %v600 = vunpack.c.l.b16 %v581
      %v601 = vunpack.c.l.b16 %v583
      %v602 = vpack.c.b16 %v595, %v594
      %v603 = vpack.c.b16 %v597, %v596
      %v604 = vpack.c.b16 %v599, %v598
      %v605 = vpack.c.b16 %v601, %v600
      %v608 = vunpack.c.l.b16 %v584
      %v609 = vunpack.c.l.b16 %v585
      %v610 = vpack.c.b16 %v609, %v608
      %vm612 = vcmask 130048
      %v614 = vsel %vm612, %v602, 0
      %v617 = vsel %vm612, %v603, 0
      %v620 = vsel %vm612, %v604, 0
      %v623 = vsel %vm612, %v605, 0
      %625 = vmatprep.subr.bf16.mxu0 0
      %626 = vmatpush1.bf16.msra.mxu0 %v610
      %627 = vmatprep.subr.bf16.mxu0 0
      %628 = vmatpush1.bf16.msra.mxu0 0
      %629 = vmatprep.subr.bf16.mxu0 0
      %630 = vmatpush1.bf16.msra.mxu0 0
      %631 = vmatprep.subr.bf16.mxu0 0
      %632 = vmatpush1.bf16.msra.mxu0 0
      %633 = vmatprep.subr.bf16.mxu0 0
      %634 = vmatpush1.bf16.msra.mxu0 0
      %635 = vmatprep.subr.bf16.mxu0 0
      %636 = vmatpush1.bf16.msra.mxu0 0
      %637 = vmatprep.subr.bf16.mxu0 0
      %638 = vmatpush1.bf16.msra.mxu0 0
      %639 = vmatprep.subr.bf16.mxu0 0
      %640 = vmatpush1.bf16.msra.mxu0 0
      %641 = vmatprep.subr.bf16.mxu0 0
      %642 = vmatpush1.bf16.msra.mxu0 0
      %643 = vmatprep.subr.bf16.mxu0 0
      %644 = vmatpush1.bf16.msra.mxu0 0
      %645 = vmatprep.subr.bf16.mxu0 0
      %646 = vmatpush1.bf16.msra.mxu0 0
      %647 = vmatprep.subr.bf16.mxu0 0
      %648 = vmatpush1.bf16.msra.mxu0 0
      %649 = vmatprep.subr.bf16.mxu0 0
      %650 = vmatpush1.bf16.msra.mxu0 0
      %651 = vmatprep.subr.bf16.mxu0 0
      %652 = vmatpush1.bf16.msra.mxu0 0
      %653 = vmatprep.subr.bf16.mxu0 0
      %654 = vmatpush1.bf16.msra.mxu0 0
      %655 = vmatprep.subr.bf16.mxu0 0
      %656 = vmatpush1.bf16.msra.mxu0 0
      %657 = vmatprep.mubr.bf16.mxu0 0
      %658 = vmatmul.mubr.bf16.gmra.mrb[0].mxu0 %v614
      %v659 = vpop.f32.mrb[0].mxu0
      %v660 = vadd.f32 0.0, %v659
      %v661 = vpop.f32.mrb[0].mxu0
      %v662 = vpop.f32.mrb[0].mxu0
      %v663 = vadd.f32 0.0, %v662
      %v664 = vpop.f32.mrb[0].mxu0
      %665 = vmatprep.mubr.bf16.mxu0 0
      %666 = vmatmul.mubr.bf16.gmra.mrb[0].mxu0 %v617
      %v667 = vpop.f32.mrb[0].mxu0
      %v668 = vadd.f32 0.0, %v667
      %v669 = vpop.f32.mrb[0].mxu0
      %v670 = vpop.f32.mrb[0].mxu0
      %v671 = vadd.f32 0.0, %v670
      %v672 = vpop.f32.mrb[0].mxu0
      %673 = vmatprep.mubr.bf16.mxu0 0
      %674 = vmatmul.mubr.bf16.gmra.mrb[0].mxu0 %v620
      %v675 = vpop.f32.mrb[0].mxu0
      %v676 = vadd.f32 0.0, %v675
      %v677 = vpop.f32.mrb[0].mxu0
      %v678 = vpop.f32.mrb[0].mxu0
      %v679 = vadd.f32 0.0, %v678
      %v680 = vpop.f32.mrb[0].mxu0
      %681 = vmatprep.mubr.bf16.mxu0 0
      %682 = vmatmul.mubr.bf16.gmra.mrb[0].mxu0 %v623
      %v683 = vpop.f32.mrb[0].mxu0
      %v684 = vadd.f32 0.0, %v683
      %v685 = vpop.f32.mrb[0].mxu0
      %v686 = vpop.f32.mrb[0].mxu0
      %v687 = vadd.f32 0.0, %v686
      %v688 = vpop.f32.mrb[0].mxu0
      %689 = vdwg.mxu0
      %v690 = vsel %vm550, %v660, 0.0
      %v691 = vsel %vm550, %v663, 0.0
      %v692 = vadd.f32 %v690, %v691
      %v693 = vsel %vm550, %v668, 0.0
      %v694 = vadd.f32 %v692, %v693
      %v695 = vsel %vm550, %v671, 0.0
      %v696 = vadd.f32 %v694, %v695
      %v697 = vsel %vm550, %v676, 0.0
      %v698 = vadd.f32 %v696, %v697
      %v699 = vsel %vm550, %v679, 0.0
      %v700 = vadd.f32 %v698, %v699
      %v701 = vsel %vm550, %v684, 0.0
      %v702 = vadd.f32 %v700, %v701
      %v703 = vsel %vm550, %v687, 0.0
      %v704 = vadd.f32 %v702, %v703
      %v705 = vrot.slane %v704, 4
      %v706 = vadd.f32 %v704, %v705
      %v707 = vrot.slane %v706, 2
      %v708 = vadd.f32 %v706, %v707
      %v709 = vrot.slane %v708, 1
      %v710 = vadd.f32 %v708, %v709
      %v711 = vadd.f32 %v710, 0.0
      %v712 = vmul.f32 %v660, %v660
      %v713 = vmul.f32 %v663, %v663
      %v714 = vmul.f32 %v668, %v668
      %v715 = vmul.f32 %v671, %v671
      %v716 = vmul.f32 %v676, %v676
      %v717 = vmul.f32 %v679, %v679
      %v718 = vmul.f32 %v684, %v684
      %v719 = vmul.f32 %v687, %v687
      %v720 = vsel %vm550, %v712, 0.0
      %v721 = vsel %vm550, %v713, 0.0
      %v722 = vadd.f32 %v720, %v721
      %v723 = vsel %vm550, %v714, 0.0
      %v724 = vadd.f32 %v722, %v723
      %v725 = vsel %vm550, %v715, 0.0
      %v726 = vadd.f32 %v724, %v725
      %v727 = vsel %vm550, %v716, 0.0
      %v728 = vadd.f32 %v726, %v727
      %v729 = vsel %vm550, %v717, 0.0
      %v730 = vadd.f32 %v728, %v729
      %v731 = vsel %vm550, %v718, 0.0
      %v732 = vadd.f32 %v730, %v731
      %v733 = vsel %vm550, %v719, 0.0
      %v734 = vadd.f32 %v732, %v733
      %v735 = vrot.slane %v734, 4
      %v736 = vadd.f32 %v734, %v735
      %v737 = vrot.slane %v736, 2
      %v738 = vadd.f32 %v736, %v737
      %v739 = vrot.slane %v738, 1
      %v740 = vadd.f32 %v738, %v739
      %v741 = vadd.f32 %v740, 0.0
      %v742 = vpack.c.bf16 %v660, %v660
      %v743 = vpack.c.bf16 %v663, %v663
      %v744 = vpack.c.bf16 %v668, %v668
      %v745 = vpack.c.bf16 %v671, %v671
      %v746 = vpack.c.bf16 %v676, %v676
      %v747 = vpack.c.bf16 %v679, %v679
      %v748 = vpack.c.bf16 %v684, %v684
      %v749 = vpack.c.bf16 %v687, %v687
      %vm750 = vcmask 60416
      %751 = vst.msk [vmem:[%s227] sm:$0xf] %vm750, %v742
      %752 = vst.msk [vmem:[%s227 + $0x4] sm:$0xf] %vm750, %v743
      %753 = vst.msk [vmem:[%s227 + $0x8] sm:$0xf] %vm750, %v744
      %754 = vst.msk [vmem:[%s227 + $0xc] sm:$0xf] %vm750, %v745
      %755 = vst.msk [vmem:[%s227 + $0x10] sm:$0xf] %vm750, %v746
      %756 = vst.msk [vmem:[%s227 + $0x14] sm:$0xf] %vm750, %v747
      %757 = vst.msk [vmem:[%s227 + $0x18] sm:$0xf] %vm750, %v748
      %758 = vst.msk [vmem:[%s227 + $0x1c] sm:$0xf] %vm750, %v749
      %v759 = vld [vmem:[%s240] sm:$0xf]
      %v760 = vld [vmem:[%s240 + $0x4] sm:$0x1]
      %v761 = vld [vmem:[%s240 + $0x8] sm:$0xf]
      %v762 = vld [vmem:[%s240 + $0xc] sm:$0x1]
      %v763 = vld [vmem:[%s240 + $0x10] sm:$0xf]
      %v764 = vld [vmem:[%s240 + $0x14] sm:$0x1]
      %v765 = vld [vmem:[%s240 + $0x18] sm:$0xf]
      %v766 = vld [vmem:[%s240 + $0x1c] sm:$0x1]
      %v767 = vld [vmem:[%s240 + $0x20] sm:$0xf]
      %v768 = vld [vmem:[%s240 + $0x24] sm:$0x1]
      %v769 = vld [vmem:[%s240 + $0x28] sm:$0xf]
      %v770 = vld [vmem:[%s240 + $0x2c] sm:$0x1]
      %v771 = vld [vmem:[%s240 + $0x30] sm:$0xf]
      %v772 = vld [vmem:[%s240 + $0x34] sm:$0x1]
      %v773 = vld [vmem:[%s240 + $0x38] sm:$0xf]
      %v774 = vld [vmem:[%s240 + $0x3c] sm:$0x1]
      %v775 = vld [vmem:[%s240] sm:$0xe]
      %v776 = vld [vmem:[%s240 + $0x8] sm:$0xe]
      %v777 = vld [vmem:[%s240 + $0x10] sm:$0xe]
      %v778 = vld [vmem:[%s240 + $0x18] sm:$0xe]
      %v779 = vld [vmem:[%s240 + $0x20] sm:$0xe]
      %v780 = vld [vmem:[%s240 + $0x28] sm:$0xe]
      %v781 = vld [vmem:[%s240 + $0x30] sm:$0xe]
      %v782 = vld [vmem:[%s240 + $0x38] sm:$0xe]
      %v783 = vld [vmem:[%s260] sm:$0xf]
      %v784 = vld [vmem:[%s260 + $0x4] sm:$0x1]
      %v785 = vld [vmem:[%s260 + $0x8] sm:$0xf]
      %v786 = vld [vmem:[%s260 + $0xc] sm:$0x1]
      %v787 = vld [vmem:[%s260 + $0x10] sm:$0xf]
      %v788 = vld [vmem:[%s260 + $0x14] sm:$0x1]
      %v789 = vld [vmem:[%s260 + $0x18] sm:$0xf]
      %v790 = vld [vmem:[%s260 + $0x1c] sm:$0x1]
      %v791 = vld [vmem:[%s260 + $0x20] sm:$0xf]
      %v792 = vld [vmem:[%s260 + $0x24] sm:$0x1]
      %v793 = vld [vmem:[%s260 + $0x28] sm:$0xf]
      %v794 = vld [vmem:[%s260 + $0x2c] sm:$0x1]
      %v795 = vld [vmem:[%s260 + $0x30] sm:$0xf]
      %v796 = vld [vmem:[%s260 + $0x34] sm:$0x1]
      %v797 = vld [vmem:[%s260 + $0x38] sm:$0xf]
      %v798 = vld [vmem:[%s260 + $0x3c] sm:$0x1]
      %v799 = vld [vmem:[%s260] sm:$0xe]
      %v800 = vld [vmem:[%s260 + $0x8] sm:$0xe]
      %v801 = vld [vmem:[%s260 + $0x10] sm:$0xe]
      %v802 = vld [vmem:[%s260 + $0x18] sm:$0xe]
      %v803 = vld [vmem:[%s260 + $0x20] sm:$0xe]
      %v804 = vld [vmem:[%s260 + $0x28] sm:$0xe]
      %v805 = vld [vmem:[%s260 + $0x30] sm:$0xe]
      %v806 = vld [vmem:[%s260 + $0x38] sm:$0xe]
      %v823 = vunpack.c.l.b16 %v759
      %v824 = vunpack.c.l.b16 %v760
      %v825 = vunpack.c.l.b16 %v761
      %v826 = vunpack.c.l.b16 %v762
      %v827 = vunpack.c.l.b16 %v763
      %v828 = vunpack.c.l.b16 %v764
      %v829 = vunpack.c.l.b16 %v765
      %v830 = vunpack.c.l.b16 %v766
      %v831 = vunpack.c.l.b16 %v767
      %v832 = vunpack.c.l.b16 %v768
      %v833 = vunpack.c.l.b16 %v769
      %v834 = vunpack.c.l.b16 %v770
      %v835 = vunpack.c.l.b16 %v771
      %v836 = vunpack.c.l.b16 %v772
      %v837 = vunpack.c.l.b16 %v773
      %v838 = vunpack.c.l.b16 %v774
      %v839 = vpack.c.b16 %v824, %v823
      %v840 = vpack.c.b16 %v826, %v825
      %v841 = vpack.c.b16 %v828, %v827
      %v842 = vpack.c.b16 %v830, %v829
      %v843 = vpack.c.b16 %v832, %v831
      %v844 = vpack.c.b16 %v834, %v833
      %v845 = vpack.c.b16 %v836, %v835
      %v846 = vpack.c.b16 %v838, %v837
      %v855 = vunpack.c.l.b16 %v775
      %v856 = vunpack.c.l.b16 %v776
      %v857 = vunpack.c.l.b16 %v777
      %v858 = vunpack.c.l.b16 %v778
      %v859 = vunpack.c.l.b16 %v779
      %v860 = vunpack.c.l.b16 %v780
      %v861 = vunpack.c.l.b16 %v781
      %v862 = vunpack.c.l.b16 %v782
      %v863 = vpack.c.b16 %v824, %v855
      %v864 = vpack.c.b16 %v826, %v856
      %v865 = vpack.c.b16 %v828, %v857
      %v866 = vpack.c.b16 %v830, %v858
      %v867 = vpack.c.b16 %v832, %v859
      %v868 = vpack.c.b16 %v834, %v860
      %v869 = vpack.c.b16 %v836, %v861
      %v870 = vpack.c.b16 %v838, %v862
      %v872 = vshrl.u32 %v863, 16
      %v874 = vshll.u32 %v863, 16
      %v876 = vrot.slane %v874, 1
      %v877 = vor.u32 %v872, %v876
      %v879 = vshrl.u32 %v864, 16
      %v881 = vshll.u32 %v864, 16
      %v883 = vrot.slane %v881, 1
      %v884 = vor.u32 %v879, %v883
      %v886 = vshrl.u32 %v865, 16
      %v888 = vshll.u32 %v865, 16
      %v890 = vrot.slane %v888, 1
      %v891 = vor.u32 %v886, %v890
      %v893 = vshrl.u32 %v866, 16
      %v895 = vshll.u32 %v866, 16
      %v897 = vrot.slane %v895, 1
      %v898 = vor.u32 %v893, %v897
      %v900 = vshrl.u32 %v867, 16
      %v902 = vshll.u32 %v867, 16
      %v904 = vrot.slane %v902, 1
      %v905 = vor.u32 %v900, %v904
      %v907 = vshrl.u32 %v868, 16
      %v909 = vshll.u32 %v868, 16
      %v911 = vrot.slane %v909, 1
      %v912 = vor.u32 %v907, %v911
      %v914 = vshrl.u32 %v869, 16
      %v916 = vshll.u32 %v869, 16
      %v918 = vrot.slane %v916, 1
      %v919 = vor.u32 %v914, %v918
      %v921 = vshrl.u32 %v870, 16
      %v923 = vshll.u32 %v870, 16
      %v925 = vrot.slane %v923, 1
      %v926 = vor.u32 %v921, %v925
      %927 = vrot.lane.b32.xlu0 %v877, 4
      %v928 = vpop.permute.xlu0 %927
      %929 = vrot.lane.b32.xlu0 %v884, 4
      %v930 = vpop.permute.xlu0 %929
      %931 = vrot.lane.b32.xlu0 %v891, 4
      %v932 = vpop.permute.xlu0 %931
      %933 = vrot.lane.b32.xlu0 %v898, 4
      %v934 = vpop.permute.xlu0 %933
      %935 = vrot.lane.b32.xlu0 %v905, 4
      %v936 = vpop.permute.xlu0 %935
      %937 = vrot.lane.b32.xlu0 %v912, 4
      %v938 = vpop.permute.xlu0 %937
      %939 = vrot.lane.b32.xlu0 %v919, 4
      %v940 = vpop.permute.xlu0 %939
      %941 = vrot.lane.b32.xlu0 %v926, 4
      %v942 = vpop.permute.xlu0 %941
      %v959 = vunpack.c.l.b16 %v783
      %v960 = vunpack.c.l.b16 %v784
      %v961 = vunpack.c.l.b16 %v785
      %v962 = vunpack.c.l.b16 %v786
      %v963 = vunpack.c.l.b16 %v787
      %v964 = vunpack.c.l.b16 %v788
      %v965 = vunpack.c.l.b16 %v789
      %v966 = vunpack.c.l.b16 %v790
      %v967 = vunpack.c.l.b16 %v791
      %v968 = vunpack.c.l.b16 %v792
      %v969 = vunpack.c.l.b16 %v793
      %v970 = vunpack.c.l.b16 %v794
      %v971 = vunpack.c.l.b16 %v795
      %v972 = vunpack.c.l.b16 %v796
      %v973 = vunpack.c.l.b16 %v797
      %v974 = vunpack.c.l.b16 %v798
      %v975 = vpack.c.b16 %v960, %v959
      %v976 = vpack.c.b16 %v962, %v961
      %v977 = vpack.c.b16 %v964, %v963
      %v978 = vpack.c.b16 %v966, %v965
      %v979 = vpack.c.b16 %v968, %v967
      %v980 = vpack.c.b16 %v970, %v969
      %v981 = vpack.c.b16 %v972, %v971
      %v982 = vpack.c.b16 %v974, %v973
      %983 = vrot.lane.b32.xlu0 %v975, 8
      %v984 = vpop.permute.xlu0 %983
      %985 = vrot.lane.b32.xlu0 %v976, 8
      %v986 = vpop.permute.xlu0 %985
      %987 = vrot.lane.b32.xlu0 %v977, 8
      %v988 = vpop.permute.xlu0 %987
      %989 = vrot.lane.b32.xlu0 %v978, 8
      %v990 = vpop.permute.xlu0 %989
      %991 = vrot.lane.b32.xlu0 %v979, 8
      %v992 = vpop.permute.xlu0 %991
      %993 = vrot.lane.b32.xlu0 %v980, 8
      %v994 = vpop.permute.xlu0 %993
      %995 = vrot.lane.b32.xlu0 %v981, 8
      %v996 = vpop.permute.xlu0 %995
      %997 = vrot.lane.b32.xlu0 %v982, 8
      %v998 = vpop.permute.xlu0 %997
      %v1007 = vunpack.c.l.b16 %v799
      %v1008 = vunpack.c.l.b16 %v800
      %v1009 = vunpack.c.l.b16 %v801
      %v1010 = vunpack.c.l.b16 %v802
      %v1011 = vunpack.c.l.b16 %v803
      %v1012 = vunpack.c.l.b16 %v804
      %v1013 = vunpack.c.l.b16 %v805
      %v1014 = vunpack.c.l.b16 %v806
      %v1015 = vpack.c.b16 %v960, %v1007
      %v1016 = vpack.c.b16 %v962, %v1008
      %v1017 = vpack.c.b16 %v964, %v1009
      %v1018 = vpack.c.b16 %v966, %v1010
      %v1019 = vpack.c.b16 %v968, %v1011
      %v1020 = vpack.c.b16 %v970, %v1012
      %v1021 = vpack.c.b16 %v972, %v1013
      %v1022 = vpack.c.b16 %v974, %v1014
      %v1024 = vshrl.u32 %v1015, 16
      %v1026 = vshll.u32 %v1015, 16
      %v1028 = vrot.slane %v1026, 1
      %v1029 = vor.u32 %v1024, %v1028
      %v1031 = vshrl.u32 %v1016, 16
      %v1033 = vshll.u32 %v1016, 16
      %v1035 = vrot.slane %v1033, 1
      %v1036 = vor.u32 %v1031, %v1035
      %v1038 = vshrl.u32 %v1017, 16
      %v1040 = vshll.u32 %v1017, 16
      %v1042 = vrot.slane %v1040, 1
      %v1043 = vor.u32 %v1038, %v1042
      %v1045 = vshrl.u32 %v1018, 16
      %v1047 = vshll.u32 %v1018, 16
      %v1049 = vrot.slane %v1047, 1
      %v1050 = vor.u32 %v1045, %v1049
      %v1052 = vshrl.u32 %v1019, 16
      %v1054 = vshll.u32 %v1019, 16
      %v1056 = vrot.slane %v1054, 1
      %v1057 = vor.u32 %v1052, %v1056
      %v1059 = vshrl.u32 %v1020, 16
      %v1061 = vshll.u32 %v1020, 16
      %v1063 = vrot.slane %v1061, 1
      %v1064 = vor.u32 %v1059, %v1063
      %v1066 = vshrl.u32 %v1021, 16
      %v1068 = vshll.u32 %v1021, 16
      %v1070 = vrot.slane %v1068, 1
      %v1071 = vor.u32 %v1066, %v1070
      %v1073 = vshrl.u32 %v1022, 16
      %v1075 = vshll.u32 %v1022, 16
      %v1077 = vrot.slane %v1075, 1
      %v1078 = vor.u32 %v1073, %v1077
      %1079 = vrot.lane.b32.xlu0 %v1029, 12
      %v1080 = vpop.permute.xlu0 %1079
      %1081 = vrot.lane.b32.xlu0 %v1036, 12
      %v1082 = vpop.permute.xlu0 %1081
      %1083 = vrot.lane.b32.xlu0 %v1043, 12
      %v1084 = vpop.permute.xlu0 %1083
      %1085 = vrot.lane.b32.xlu0 %v1050, 12
      %v1086 = vpop.permute.xlu0 %1085
      %1087 = vrot.lane.b32.xlu0 %v1057, 12
      %v1088 = vpop.permute.xlu0 %1087
      %1089 = vrot.lane.b32.xlu0 %v1064, 12
      %v1090 = vpop.permute.xlu0 %1089
      %1091 = vrot.lane.b32.xlu0 %v1071, 12
      %v1092 = vpop.permute.xlu0 %1091
      %1093 = vrot.lane.b32.xlu0 %v1078, 12
      %v1094 = vpop.permute.xlu0 %1093
      %v1097 = vsel %vm525, %v839, %v928
      %v1100 = vsel %vm525, %v840, %v930
      %v1103 = vsel %vm525, %v841, %v932
      %v1106 = vsel %vm525, %v842, %v934
      %v1109 = vsel %vm525, %v843, %v936
      %v1112 = vsel %vm525, %v844, %v938
      %v1115 = vsel %vm525, %v845, %v940
      %v1118 = vsel %vm525, %v846, %v942
      %v1120 = vsel %vm550, %v1097, %v984
      %v1122 = vsel %vm550, %v1100, %v986
      %v1124 = vsel %vm550, %v1103, %v988
      %v1126 = vsel %vm550, %v1106, %v990
      %v1128 = vsel %vm550, %v1109, %v992
      %v1130 = vsel %vm550, %v1112, %v994
      %v1132 = vsel %vm550, %v1115, %v996
      %v1134 = vsel %vm550, %v1118, %v998
      %v1136 = vsel %vm567, %v1120, %v1080
      %v1138 = vsel %vm567, %v1122, %v1082
      %v1140 = vsel %vm567, %v1124, %v1084
      %v1142 = vsel %vm567, %v1126, %v1086
      %v1144 = vsel %vm567, %v1128, %v1088
      %v1146 = vsel %vm567, %v1130, %v1090
      %v1148 = vsel %vm567, %v1132, %v1092
      %v1150 = vsel %vm567, %v1134, %v1094
      %v1159 = vunpack.c.l.b16 %v1136
      %v1160 = vunpack.c.h.b16 %v1136
      %v1161 = vunpack.c.l.b16 %v1138
      %v1162 = vunpack.c.h.b16 %v1138
      %v1163 = vunpack.c.l.b16 %v1140
      %v1164 = vunpack.c.h.b16 %v1140
      %v1165 = vunpack.c.l.b16 %v1142
      %v1166 = vunpack.c.h.b16 %v1142
      %v1167 = vunpack.c.l.b16 %v1144
      %v1168 = vunpack.c.h.b16 %v1144
      %v1169 = vunpack.c.l.b16 %v1146
      %v1170 = vunpack.c.h.b16 %v1146
      %v1171 = vunpack.c.l.b16 %v1148
      %v1172 = vunpack.c.h.b16 %v1148
      %v1173 = vunpack.c.l.b16 %v1150
      %v1174 = vunpack.c.h.b16 %v1150
      %v1175 = vpack.c.b16 %v1159, %v1159
      %v1176 = vpack.c.b16 %v1160, %v1160
      %v1177 = vpack.c.b16 %v1161, %v1161
      %v1178 = vpack.c.b16 %v1162, %v1162
      %v1179 = vpack.c.b16 %v1163, %v1163
      %v1180 = vpack.c.b16 %v1164, %v1164
      %v1181 = vpack.c.b16 %v1165, %v1165
      %v1182 = vpack.c.b16 %v1166, %v1166
      %v1183 = vpack.c.b16 %v1167, %v1167
      %v1184 = vpack.c.b16 %v1168, %v1168
      %v1185 = vpack.c.b16 %v1169, %v1169
      %v1186 = vpack.c.b16 %v1170, %v1170
      %v1187 = vpack.c.b16 %v1171, %v1171
      %v1188 = vpack.c.b16 %v1172, %v1172
      %v1189 = vpack.c.b16 %v1173, %v1173
      %v1190 = vpack.c.b16 %v1174, %v1174
      %vm1191 = vsmask.f32 3328
      %vm1192 = vsmask.f32 7440
      %vm1193 = vmor %vm1191, %vm1192
      %v1195 = vshrl.u32 %v1175, 16
      %v1197 = vrot.slane %v1195, 4
      %v1198 = vshll.u32 %v1175, 16
      %v1200 = vrot.slane %v1198, 5
      %v1201 = vor.u32 %v1197, %v1200
      %v1202 = vrot.slane %v1201, 4
      %v1204 = vshll.u32 %v1176, 16
      %v1206 = vrot.slane %v1204, 5
      %v1207 = vsel %vm1193, %v1202, %v1206
      %v1209 = vshrl.u32 %v1177, 16
      %v1211 = vrot.slane %v1209, 4
      %v1212 = vshll.u32 %v1177, 16
      %v1214 = vrot.slane %v1212, 5
      %v1215 = vor.u32 %v1211, %v1214
      %v1216 = vrot.slane %v1215, 4
      %v1218 = vshll.u32 %v1178, 16
      %v1220 = vrot.slane %v1218, 5
      %v1221 = vsel %vm1193, %v1216, %v1220
      %v1223 = vshrl.u32 %v1179, 16
      %v1225 = vrot.slane %v1223, 4
      %v1226 = vshll.u32 %v1179, 16
      %v1228 = vrot.slane %v1226, 5
      %v1229 = vor.u32 %v1225, %v1228
      %v1230 = vrot.slane %v1229, 4
      %v1232 = vshll.u32 %v1180, 16
      %v1234 = vrot.slane %v1232, 5
      %v1235 = vsel %vm1193, %v1230, %v1234
      %v1237 = vshrl.u32 %v1181, 16
      %v1239 = vrot.slane %v1237, 4
      %v1240 = vshll.u32 %v1181, 16
      %v1242 = vrot.slane %v1240, 5
      %v1243 = vor.u32 %v1239, %v1242
      %v1244 = vrot.slane %v1243, 4
      %v1246 = vshll.u32 %v1182, 16
      %v1248 = vrot.slane %v1246, 5
      %v1249 = vsel %vm1193, %v1244, %v1248
      %v1251 = vshrl.u32 %v1183, 16
      %v1253 = vrot.slane %v1251, 4
      %v1254 = vshll.u32 %v1183, 16
      %v1256 = vrot.slane %v1254, 5
      %v1257 = vor.u32 %v1253, %v1256
      %v1258 = vrot.slane %v1257, 4
      %v1260 = vshll.u32 %v1184, 16
      %v1262 = vrot.slane %v1260, 5
      %v1263 = vsel %vm1193, %v1258, %v1262
      %v1265 = vshrl.u32 %v1185, 16
      %v1267 = vrot.slane %v1265, 4
      %v1268 = vshll.u32 %v1185, 16
      %v1270 = vrot.slane %v1268, 5
      %v1271 = vor.u32 %v1267, %v1270
      %v1272 = vrot.slane %v1271, 4
      %v1274 = vshll.u32 %v1186, 16
      %v1276 = vrot.slane %v1274, 5
      %v1277 = vsel %vm1193, %v1272, %v1276
      %v1279 = vshrl.u32 %v1187, 16
      %v1281 = vrot.slane %v1279, 4
      %v1282 = vshll.u32 %v1187, 16
      %v1284 = vrot.slane %v1282, 5
      %v1285 = vor.u32 %v1281, %v1284
      %v1286 = vrot.slane %v1285, 4
      %v1288 = vshll.u32 %v1188, 16
      %v1290 = vrot.slane %v1288, 5
      %v1291 = vsel %vm1193, %v1286, %v1290
      %v1293 = vshrl.u32 %v1189, 16
      %v1295 = vrot.slane %v1293, 4
      %v1296 = vshll.u32 %v1189, 16
      %v1298 = vrot.slane %v1296, 5
      %v1299 = vor.u32 %v1295, %v1298
      %v1300 = vrot.slane %v1299, 4
      %v1302 = vshll.u32 %v1190, 16
      %v1304 = vrot.slane %v1302, 5
      %v1305 = vsel %vm1193, %v1300, %v1304
      %s1306 = scalar_lea.vmem %s217, 8
      %v1307 = vld [vmem:[%s1306] sm:$0xf]
      %v1308 = vld [vmem:[%s1306 + $0x4] sm:$0xf]
      %v1309 = vunpack.c.l.b16 %v1207
      %v1310 = vunpack.c.l.b16 %v1221
      %v1311 = vunpack.c.l.b16 %v1235
      %v1312 = vunpack.c.l.b16 %v1249
      %v1313 = vunpack.c.l.b16 %v1263
      %v1314 = vunpack.c.l.b16 %v1277
      %v1315 = vunpack.c.l.b16 %v1291
      %v1316 = vunpack.c.l.b16 %v1305
      %v1317 = vpack.c.b16 %v1310, %v1309
      %v1318 = vpack.c.b16 %v1312, %v1311
      %v1319 = vpack.c.b16 %v1314, %v1313
      %v1320 = vpack.c.b16 %v1316, %v1315
      %v1323 = vunpack.c.l.b16 %v1307
      %v1324 = vunpack.c.l.b16 %v1308
      %v1325 = vpack.c.b16 %v1324, %v1323
      %v1328 = vsel %vm612, %v1317, 0
      %v1331 = vsel %vm612, %v1318, 0
      %v1334 = vsel %vm612, %v1319, 0
      %v1337 = vsel %vm612, %v1320, 0
      %1339 = vmatprep.subr.bf16.mxu0 0
      %1340 = vmatpush1.bf16.msra.mxu0 %v1325
      %1341 = vmatprep.subr.bf16.mxu0 0
      %1342 = vmatpush1.bf16.msra.mxu0 0
      %1343 = vmatprep.subr.bf16.mxu0 0
      %1344 = vmatpush1.bf16.msra.mxu0 0
      %1345 = vmatprep.subr.bf16.mxu0 0
      %1346 = vmatpush1.bf16.msra.mxu0 0
      %1347 = vmatprep.subr.bf16.mxu0 0
      %1348 = vmatpush1.bf16.msra.mxu0 0
      %1349 = vmatprep.subr.bf16.mxu0 0
      %1350 = vmatpush1.bf16.msra.mxu0 0
      %1351 = vmatprep.subr.bf16.mxu0 0
      %1352 = vmatpush1.bf16.msra.mxu0 0
      %1353 = vmatprep.subr.bf16.mxu0 0
      %1354 = vmatpush1.bf16.msra.mxu0 0
      %1355 = vmatprep.subr.bf16.mxu0 0
      %1356 = vmatpush1.bf16.msra.mxu0 0
      %1357 = vmatprep.subr.bf16.mxu0 0
      %1358 = vmatpush1.bf16.msra.mxu0 0
      %1359 = vmatprep.subr.bf16.mxu0 0
      %1360 = vmatpush1.bf16.msra.mxu0 0
      %1361 = vmatprep.subr.bf16.mxu0 0
      %1362 = vmatpush1.bf16.msra.mxu0 0
      %1363 = vmatprep.subr.bf16.mxu0 0
      %1364 = vmatpush1.bf16.msra.mxu0 0
      %1365 = vmatprep.subr.bf16.mxu0 0
      %1366 = vmatpush1.bf16.msra.mxu0 0
      %1367 = vmatprep.subr.bf16.mxu0 0
      %1368 = vmatpush1.bf16.msra.mxu0 0
      %1369 = vmatprep.subr.bf16.mxu0 0
      %1370 = vmatpush1.bf16.msra.mxu0 0
      %1371 = vmatprep.mubr.bf16.mxu0 0
      %1372 = vmatmul.mubr.bf16.gmra.mrb[0].mxu0 %v1328
      %v1373 = vpop.f32.mrb[0].mxu0
      %v1374 = vadd.f32 0.0, %v1373
      %v1375 = vpop.f32.mrb[0].mxu0
      %v1376 = vpop.f32.mrb[0].mxu0
      %v1377 = vadd.f32 0.0, %v1376
      %v1378 = vpop.f32.mrb[0].mxu0
      %1379 = vmatprep.mubr.bf16.mxu0 0
      %1380 = vmatmul.mubr.bf16.gmra.mrb[0].mxu0 %v1331
      %v1381 = vpop.f32.mrb[0].mxu0
      %v1382 = vadd.f32 0.0, %v1381
      %v1383 = vpop.f32.mrb[0].mxu0
      %v1384 = vpop.f32.mrb[0].mxu0
      %v1385 = vadd.f32 0.0, %v1384
      %v1386 = vpop.f32.mrb[0].mxu0
      %1387 = vmatprep.mubr.bf16.mxu0 0
      %1388 = vmatmul.mubr.bf16.gmra.mrb[0].mxu0 %v1334
      %v1389 = vpop.f32.mrb[0].mxu0
      %v1390 = vadd.f32 0.0, %v1389
      %v1391 = vpop.f32.mrb[0].mxu0
      %v1392 = vpop.f32.mrb[0].mxu0
      %v1393 = vadd.f32 0.0, %v1392
      %v1394 = vpop.f32.mrb[0].mxu0
      %1395 = vmatprep.mubr.bf16.mxu0 0
      %1396 = vmatmul.mubr.bf16.gmra.mrb[0].mxu0 %v1337
      %v1397 = vpop.f32.mrb[0].mxu0
      %v1398 = vadd.f32 0.0, %v1397
      %v1399 = vpop.f32.mrb[0].mxu0
      %v1400 = vpop.f32.mrb[0].mxu0
      %v1401 = vadd.f32 0.0, %v1400
      %v1402 = vpop.f32.mrb[0].mxu0
      %1403 = vdwg.mxu0
      %v1404 = vsel %vm550, %v1374, 0.0
      %v1405 = vsel %vm550, %v1377, 0.0
      %v1406 = vadd.f32 %v1404, %v1405
      %v1407 = vsel %vm550, %v1382, 0.0
      %v1408 = vadd.f32 %v1406, %v1407
      %v1409 = vsel %vm550, %v1385, 0.0
      %v1410 = vadd.f32 %v1408, %v1409
      %v1411 = vsel %vm550, %v1390, 0.0
      %v1412 = vadd.f32 %v1410, %v1411
      %v1413 = vsel %vm550, %v1393, 0.0
      %v1414 = vadd.f32 %v1412, %v1413
      %v1415 = vsel %vm550, %v1398, 0.0
      %v1416 = vadd.f32 %v1414, %v1415
      %v1417 = vsel %vm550, %v1401, 0.0
      %v1418 = vadd.f32 %v1416, %v1417
      %v1419 = vrot.slane %v1418, 4
      %v1420 = vadd.f32 %v1418, %v1419
      %v1421 = vrot.slane %v1420, 2
      %v1422 = vadd.f32 %v1420, %v1421
      %v1423 = vrot.slane %v1422, 1
      %v1424 = vadd.f32 %v1422, %v1423
      %v1425 = vadd.f32 %v711, %v1424
      %v1426 = vmul.f32 %v1374, %v1374
      %v1427 = vmul.f32 %v1377, %v1377
      %v1428 = vmul.f32 %v1382, %v1382
      %v1429 = vmul.f32 %v1385, %v1385
      %v1430 = vmul.f32 %v1390, %v1390
      %v1431 = vmul.f32 %v1393, %v1393
      %v1432 = vmul.f32 %v1398, %v1398
      %v1433 = vmul.f32 %v1401, %v1401
      %v1434 = vsel %vm550, %v1426, 0.0
      %v1435 = vsel %vm550, %v1427, 0.0
      %v1436 = vadd.f32 %v1434, %v1435
      %v1437 = vsel %vm550, %v1428, 0.0
      %v1438 = vadd.f32 %v1436, %v1437
      %v1439 = vsel %vm550, %v1429, 0.0
      %v1440 = vadd.f32 %v1438, %v1439
      %v1441 = vsel %vm550, %v1430, 0.0
      %v1442 = vadd.f32 %v1440, %v1441
      %v1443 = vsel %vm550, %v1431, 0.0
      %v1444 = vadd.f32 %v1442, %v1443
      %v1445 = vsel %vm550, %v1432, 0.0
      %v1446 = vadd.f32 %v1444, %v1445
      %v1447 = vsel %vm550, %v1433, 0.0
      %v1448 = vadd.f32 %v1446, %v1447
      %v1449 = vrot.slane %v1448, 4
      %v1450 = vadd.f32 %v1448, %v1449
      %v1451 = vrot.slane %v1450, 2
      %v1452 = vadd.f32 %v1450, %v1451
      %v1453 = vrot.slane %v1452, 1
      %v1454 = vadd.f32 %v1452, %v1453
      %v1455 = vadd.f32 %v741, %v1454
      %v1456 = vpack.c.bf16 %v1374, %v1374
      %v1457 = vpack.c.bf16 %v1377, %v1377
      %v1458 = vpack.c.bf16 %v1382, %v1382
      %v1459 = vpack.c.bf16 %v1385, %v1385
      %v1460 = vpack.c.bf16 %v1390, %v1390
      %v1461 = vpack.c.bf16 %v1393, %v1393
      %v1462 = vpack.c.bf16 %v1398, %v1398
      %v1463 = vpack.c.bf16 %v1401, %v1401
      %s1464 = scalar_lea.vmem %s227, 32
      %1465 = vst.msk [vmem:[%s1464] sm:$0xf] %vm750, %v1456
      %1466 = vst.msk [vmem:[%s1464 + $0x4] sm:$0xf] %vm750, %v1457
      %1467 = vst.msk [vmem:[%s1464 + $0x8] sm:$0xf] %vm750, %v1458
      %1468 = vst.msk [vmem:[%s1464 + $0xc] sm:$0xf] %vm750, %v1459
      %1469 = vst.msk [vmem:[%s1464 + $0x10] sm:$0xf] %vm750, %v1460
      %1470 = vst.msk [vmem:[%s1464 + $0x14] sm:$0xf] %vm750, %v1461
      %1471 = vst.msk [vmem:[%s1464 + $0x18] sm:$0xf] %vm750, %v1462
      %1472 = vst.msk [vmem:[%s1464 + $0x1c] sm:$0xf] %vm750, %v1463
      %vm1473 = vcmask 1040384
      %v1474 = vsel %vm1473, %v1425, %v1455
      %vm1475 = vcmask 58368
      %1476 = vst.msk [vmem:[%s236] sm:$0x3] %vm1475, %v1474
      %s1477 = smul.u32 2, %s20
      %p1478 = scmp.lt.s32.totalorder %s19, 1
      %s1479 = scalar_select %p1478, %s19, 1
      %p1480 = scmp.lt.s32.totalorder %s1477, 3
      %s1481 = scalar_select %p1480, %s1477, 3
      %s1482 = smul.addr %s1481, 8
      %s1483 = smul.addr %s1479, 32
      %s1484 = sadd.s32 %s1482, %s1483
      %s1485 = smul.addr %s1484, 4
      %s1486 = scalar_lea.vmem %s2, %s1485
      %p1487 = scmp.lt.s32.totalorder %s19, 1
      %s1488 = scalar_select %p1487, %s19, 1
      %p1489 = scmp.lt.s32.totalorder %s20, 1
      %s1490 = scalar_select %p1489, %s20, 1
      %s1491 = smul.addr %s1488, 2
      %s1492 = sadd.s32 %s1490, %s1491
      %s1493 = smul.addr %s1492, 2
      %s1494 = scalar_lea.vmem %s3, %s1493
      // Predicated region
      $region29: #{unet_up_forward.2} parent=27 // pred_check
        %p1495 = pneg %p99
      $region30: #{unet_up_forward.2} parent=27 // pred_check_branch
        %1497 = sbr.rel (%p1495) target = $region32
      $region31: #{unet_up_forward.2} parent=27 // pred_region
        %s1498 = smul.u32 2, %s20
      $region32: #{unet_up_forward.2} parent=27 // pred_fallthru
        _
      // Predicated region
      $region33: #{unet_up_forward.2} parent=27 // pred_check
        %p1499 = pneg %p127
      $region34: #{unet_up_forward.2} parent=27 // pred_check_branch
        %1501 = sbr.rel (%p1499) target = $region36
      $region35: #{unet_up_forward.2} parent=27 // pred_region
        _
      $region36: #{unet_up_forward.2} parent=27 // pred_fallthru
        _
    $region28: #{unet_up_forward.2} parent=5 // pred_fallthru
      _
    %p1502 = scmp.le.s32.totalorder 2, %s10
    // Predicated region
    $region37: #{unet_up_forward.2} parent=5 // pred_check
      %p1503 = pneg %p1502
    $region38: #{unet_up_forward.2} parent=5 // pred_check_branch
      %1505 = sbr.rel (%p1503) target = $region40
    $region39: #{unet_up_forward.2} parent=5 // pred_region
      %s1506 = ssub.s32 %s10, 2
      // Predicated region
      $region41: #{unet_up_forward.2} parent=39 // pred_check
        %p1507 = pneg %p105
      $region42: #{unet_up_forward.2} parent=39 // pred_check_branch
        %1509 = sbr.rel (%p1507) target = $region44
      $region43: #{unet_up_forward.2} parent=39 // pred_region
        %s1510 = smul.u32 2, %s22
        %p1511 = scmp.lt.s32.totalorder %s21, 1
        %s1512 = scalar_select %p1511, %s21, 1
        %p1513 = scmp.lt.s32.totalorder %s1510, 3
        %s1514 = scalar_select %p1513, %s1510, 3
        %s1515 = smul.addr %s1514, 8
        %s1516 = smul.addr %s1512, 32
        %s1517 = sadd.s32 %s1515, %s1516
        %s1518 = smul.addr %s1517, 4
        %s1519 = scalar_lea.vmem %s2, %s1518
      $region44: #{unet_up_forward.2} parent=39 // pred_fallthru
        _
      // Predicated region
      $region45: #{unet_up_forward.2} parent=39 // pred_check
        %p1520 = pneg %p133
      $region46: #{unet_up_forward.2} parent=39 // pred_check_branch
        %1522 = sbr.rel (%p1520) target = $region48
      $region47: #{unet_up_forward.2} parent=39 // pred_region
        %p1523 = scmp.lt.s32.totalorder %s21, 1
        %s1524 = scalar_select %p1523, %s21, 1
        %p1525 = scmp.lt.s32.totalorder %s22, 1
        %s1526 = scalar_select %p1525, %s22, 1
        %s1527 = smul.addr %s1524, 2
        %s1528 = sadd.s32 %s1526, %s1527
        %s1529 = smul.addr %s1528, 2
        %s1530 = scalar_lea.vmem %s3, %s1529
      $region48: #{unet_up_forward.2} parent=39 // pred_fallthru
        _
    $region40: #{unet_up_forward.2} parent=5 // pred_fallthru
      _
  $region6: #{unet_up_forward.2} parent=0 // loop_footer
    %s14 = sadd.s32 1, %s10
  $region7: #{unet_up_forward.2} parent=0 // loop_footer_branch
    %9 = sbr.rel target = $region3
  $region8: #{unet_up_forward.2} parent=0 // loop_exit
    _

</llo_original>
